<compile_context>
chip_gen: v6e
topology: v6e:2x2x1
jax: 0.10.0
libtpu: 0.0.40
codegen_flags: <defaults>
</compile_context>

<pallas_src>
import functools

import jax
import jax.numpy as jnp
import numpy as np
from jax.experimental import pallas as pl
from jax.experimental.pallas import tpu as pltpu


def _round_up(x, m):
    return ((x + m - 1) // m) * m


def _keep_last_duplicate(indices, masks):
    """Zero the masks of all but the last occurrence of a duplicated index per
    row, mirroring the last-write-wins behaviour of `targets[index, idx] = m`."""
    K = indices.shape[1]
    same = indices[:, :, None] == indices[:, None, :]        # (B, K, K)
    kk = jnp.arange(K)
    later = kk[None, None, :] > kk[None, :, None]            # (1, K, K)
    has_later_dup = jnp.any(same & later, axis=-1)           # (B, K)
    return jnp.where(has_later_dup, 0.0, masks)


def _pick_batch_tile(B, tb_max):
    tb_max = max(8, _round_up(tb_max, 8))
    Bp8 = _round_up(B, 8)
    if Bp8 <= tb_max:
        # Whole batch fits in one tile.  Split in two (when large enough) so
        # the "parallel" batch axis keeps both TensorCores of a v7x chip busy.
        if Bp8 >= 128:
            return _round_up((Bp8 + 1) // 2, 8)
        return Bp8
    return tb_max


def _pick_vocab_tile(V, tv_max):
    tv_max = max(256, (tv_max // 256) * 256)   # multiple of 256 (MXU/lane friendly)
    return min(tv_max, _round_up(V, 256))


def _vmem_limit_bytes(est):
    try:
        cap = int(pltpu.get_tpu_info().vmem_capacity_bytes)
    except Exception:
        cap = 64 * 2**20                        # conservative fallback (v7x per-core)
    return int(min(int(cap * 0.85), max(32 * 2**20, 2 * est)))


def lse_kernel(x_ref, wet_ref, vmask_ref, lse_ref, m_sc, l_sc, *, nv, has_vpad):
    """Online logsumexp over V tiles of logits = x @ word_emb.T."""
    v = pl.program_id(1)

    @pl.when(v == 0)
    def _init():
        m_sc[...] = jnp.full_like(m_sc, -1e30)
        l_sc[...] = jnp.zeros_like(l_sc)

    # (tb, tv) logits tile, f32 accumulation on the MXU.
    logits = jnp.dot(x_ref[...], wet_ref[...], preferred_element_type=jnp.float32)
    if has_vpad:
        # Additive -1e30 mask on padded vocab columns (all-zero for non-last
        # tiles); only compiled in at all when V % tv != 0.
        logits = logits + vmask_ref[...]

    m_prev = m_sc[...]
    m_new = jnp.maximum(m_prev, jnp.max(logits, axis=-1, keepdims=True))
    l_sc[...] = (jnp.exp(m_prev - m_new) * l_sc[...]
                 + jnp.sum(jnp.exp(logits - m_new), axis=-1, keepdims=True))
    m_sc[...] = m_new

    @pl.when(v == nv - 1)
    def _finalize():
        lse = m_sc[...] + jnp.log(l_sc[...])
        # Lane-replicated store: full-width unmasked vst; wrapper reads lane 0.
        # NOTE: running stats stay (tb, 1); widening them is a <1% lever.
        lse_ref[...] = jnp.broadcast_to(lse, lse_ref.shape)


def linear_keywords_decoder_loss(feats, keyword_indices, keyword_masks,
                                 W, bias, word_emb, *,
                                 tb=512, tv=2048,
                                 compute_dtype=jnp.bfloat16, wet_buffers=2):
    """Matches LinearKeywordsDecoder.forward with binary=False."""
    B, F = feats.shape
    E = W.shape[0]                  # nn.Linear(feat_size, emb_size): W is (E, F)
    V = word_emb.shape[0]
    cd = compute_dtype

    # ---- wrapper-side math (tiny vs the (B, V) logits sweep) ---------------
    # normalize_mask + last-write-wins dedupe (matches the dense scatter).
    masks_n = keyword_masks.astype(jnp.float32)
    masks_n = masks_n / (masks_n.sum(axis=1, keepdims=True) + 1e-7)
    masks_n = _keep_last_duplicate(keyword_indices, masks_n)

    # proj_fc hoisted out of the V loop: x = feats @ W.T + b (f32 accumulate).
    x = jnp.dot(feats.astype(cd), W.T.astype(cd),
                preferred_element_type=jnp.float32) + bias.astype(jnp.float32)
    x_cd = x.astype(cd)

    # K-sparse target term sum_k mask_k * logits[:, idx_k] via a (B, K, E)
    # gather of word_emb -- no dense (B, V) target, no per-V-tile K loop.
    g = jnp.take(word_emb, keyword_indices.astype(jnp.int32), axis=0).astype(cd)
    t_k = jnp.einsum('be,bke->bk', x_cd, g, preferred_element_type=jnp.float32)
    t_term = jnp.sum(masks_n * t_k, axis=-1)           # (B,)
    t_sum = jnp.sum(masks_n, axis=-1)                  # (B,)

    # ---- tiling ------------------------------------------------------------
    tb = _pick_batch_tile(B, tb)
    Bp = _round_up(B, tb)
    tv = _pick_vocab_tile(V, tv)
    Vp = _round_up(V, tv)
    nv = Vp // tv
    has_vpad = (Vp != V)

    x_p = jnp.pad(x_cd, ((0, Bp - B), (0, 0)))                        # (Bp, E)
    wet = jnp.pad(word_emb.T.astype(cd), ((0, 0), (0, Vp - V)))       # (E, Vp)
    vmask = jnp.where(jnp.arange(Vp)[None, :] < V, 0.0, -1e30).astype(jnp.float32)

    cd_bytes = jnp.dtype(cd).itemsize
    est = (2 * tb * E * cd_bytes                      # x tile (double-buffered)
           + max(2, wet_buffers) * E * tv * cd_bytes  # word_emb tile buffers
           + 2 * tv * 4                               # vocab-pad mask tile
           + 2 * tb * 128 * 4                         # lse output tile
           + 2 * tb * 128 * 4)                        # lane-padded running stats
    vmem_limit = _vmem_limit_bytes(est)

    wet_kwargs = {}
    if wet_buffers != 2:
        # Deeper word_emb pipeline (e.g. 3 on v5e if still DMA-exposed).
        wet_kwargs["pipeline_mode"] = pl.Buffered(wet_buffers)

    lse_full = pl.pallas_call(
        functools.partial(lse_kernel, nv=nv, has_vpad=has_vpad),
        out_shape=jax.ShapeDtypeStruct((Bp, 128), jnp.float32),
        grid=(Bp // tb, nv),
        in_specs=[
            pl.BlockSpec((tb, E), lambda b, v: (b, 0)),                # x tile
            pl.BlockSpec((E, tv), lambda b, v: (0, v), **wet_kwargs),  # word_emb.T tile
            pl.BlockSpec((1, tv), lambda b, v: (0, v)),                # vocab pad mask
        ],
        out_specs=pl.BlockSpec((tb, 128), lambda b, v: (b, 0)),
        scratch_shapes=[
            pltpu.VMEM((tb, 1), jnp.float32),   # running max
            pltpu.VMEM((tb, 1), jnp.float32),   # running sum(exp)
        ],
        compiler_params=pltpu.CompilerParams(
            dimension_semantics=("parallel", "arbitrary"),
            vmem_limit_bytes=vmem_limit,
        ),
    )(x_p, wet, vmask)

    lse = lse_full[:B, 0]
    return t_sum * lse - t_term


def reference_loss(feats, keyword_indices, keyword_masks, W, bias, word_emb):
    x = jnp.dot(feats, W.T, preferred_element_type=jnp.float32) + bias
    logits = jnp.dot(x, word_emb.T, preferred_element_type=jnp.float32)
    B, V = logits.shape
    masks_n = keyword_masks / (keyword_masks.sum(axis=1, keepdims=True) + 1e-7)
    targets = jnp.zeros((B, V), jnp.float32).at[
        jnp.arange(B)[:, None], keyword_indices].set(masks_n)
    logp = jax.nn.log_softmax(logits, axis=-1)
    return jnp.sum(-logp * targets, axis=-1)


if __name__ == "__main__":
    # Small shapes that still exercise the batch split, V padding and both
    # dtype paths.
    B, F, E, V, K = 200, 64, 64, 2000, 4

    key = jax.random.PRNGKey(0)
    k_feats, k_w, k_b, k_emb, k_mask = jax.random.split(key, 5)

    feats = jax.random.normal(k_feats, (B, F), jnp.float32)
    W = jax.random.normal(k_w, (E, F), jnp.float32) * 0.1      # nn.Linear weight
    bias = jax.random.normal(k_b, (E,), jnp.float32) * 0.1     # nn.Linear bias
    word_emb = jax.random.normal(k_emb, (V, E), jnp.float32)   # registered buffer

    # Distinct keyword indices per row (deterministic), positive masks.
    keyword_indices = (jnp.arange(K)[None, :] * 7
                       + jnp.arange(B)[:, None] * 13 + 1) % V
    keyword_masks = jax.random.uniform(k_mask, (B, K), jnp.float32) + 0.1

    ref = reference_loss(feats, keyword_indices, keyword_masks, W, bias, word_emb)

    # Full-f32 run: tight numerical check against the reference.
    loss_f32 = linear_keywords_decoder_loss(
        feats, keyword_indices, keyword_masks, W, bias, word_emb,
        compute_dtype=jnp.float32)
    loss_f32 = jax.block_until_ready(loss_f32)
    np.testing.assert_allclose(np.asarray(loss_f32), np.asarray(ref),
                               rtol=1e-4, atol=1e-4)

    # Default optimized path (bf16 MXU operands, f32 accumulation): looser check.
    loss_bf16 = linear_keywords_decoder_loss(
        feats, keyword_indices, keyword_masks, W, bias, word_emb)
    loss_bf16 = jax.block_until_ready(loss_bf16)
    np.testing.assert_allclose(np.asarray(loss_bf16), np.asarray(ref),
                               rtol=3e-2, atol=3e-2)

    # TODO(synk): binary=True branch (BCE-with-logits over logits[:, 1:]) not
    # implemented; the default non-binary path is what this kernel reproduces.
    print("KERNEL_OK")
</pallas_src>

<mosaic_0001>
module attributes {stable_mosaic.version = 11 : i64} {
  func.func @lse_kernel(%arg0: i32, %arg1: i32, %arg2: memref<104x64xf32, #tpu.memory_space<vmem>>, %arg3: memref<64x2048xf32, #tpu.memory_space<vmem>>, %arg4: memref<1x2048xf32, #tpu.memory_space<vmem>>, %arg5: memref<104x128xf32, #tpu.memory_space<vmem>>, %arg6: memref<104x1xf32, #tpu.memory_space<vmem>>, %arg7: memref<104x1xf32, #tpu.memory_space<vmem>>) attributes {dimension_semantics = [#tpu.dimension_semantics<parallel>, #tpu.dimension_semantics<arbitrary>], iteration_bounds = array<i64: 2, 1>, scalar_prefetch = 0 : i64, scratch_operands = 2 : i64, tpu.core_type = #tpu.core_type<tc>, window_params = [{transform_indices = @transform_0, window_bounds = array<i64: 104, 64>}, {transform_indices = @transform_1, window_bounds = array<i64: 64, 2048>}, {transform_indices = @transform_2, window_bounds = array<i64: 1, 2048>}, {transform_indices = @transform_3, window_bounds = array<i64: 104, 128>}]} {
    %c0_i32 = arith.constant 0 : i32
    %0 = arith.cmpi eq, %arg1, %c0_i32 : i32
    %1 = arith.extui %0 : i1 to i32
    %c0_i32_0 = arith.constant 0 : i32
    %2 = arith.cmpi ne, %1, %c0_i32_0 : i32
    scf.if %2 {
      %cst_18 = arith.constant -1.000000e+30 : f32
      %28 = vector.broadcast %cst_18 : f32 to vector<104x1xf32>
      %c0_19 = arith.constant 0 : index
      %c0_20 = arith.constant 0 : index
      %29 = vector.load %arg6[%c0_19, %c0_20] : memref<104x1xf32, #tpu.memory_space<vmem>>, vector<104x1xf32>
      tpu.vector_store %arg6[%c0_19, %c0_20], %28 {strides = array<i32>} : memref<104x1xf32, #tpu.memory_space<vmem>>, vector<104x1xf32>,
      %cst_21 = arith.constant 0.000000e+00 : f32
      %30 = vector.broadcast %cst_21 : f32 to vector<104x1xf32>
      %c0_22 = arith.constant 0 : index
      %c0_23 = arith.constant 0 : index
      %31 = vector.load %arg7[%c0_22, %c0_23] : memref<104x1xf32, #tpu.memory_space<vmem>>, vector<104x1xf32>
      tpu.vector_store %arg7[%c0_22, %c0_23], %30 {strides = array<i32>} : memref<104x1xf32, #tpu.memory_space<vmem>>, vector<104x1xf32>,
    } else {
    }
    %c0 = arith.constant 0 : index
    %c0_1 = arith.constant 0 : index
    %3 = vector.load %arg2[%c0, %c0_1] : memref<104x64xf32, #tpu.memory_space<vmem>>, vector<104x64xf32>
    %c0_2 = arith.constant 0 : index
    %c0_3 = arith.constant 0 : index
    %4 = vector.load %arg3[%c0_2, %c0_3] : memref<64x2048xf32, #tpu.memory_space<vmem>>, vector<64x2048xf32>
    %cst = arith.constant dense<0.000000e+00> : vector<104x2048xf32>
    %5 = tpu.matmul %3, %4, %cst {dimension_numbers = #tpu.dot_dimension_numbers<[1], [0], [0], [1], [0, 0, 1, 1], [], []>} : vector<104x64xf32>, vector<64x2048xf32>, vector<104x2048xf32> -> vector<104x2048xf32>
    %c0_4 = arith.constant 0 : index
    %c0_5 = arith.constant 0 : index
    %6 = vector.load %arg4[%c0_4, %c0_5] : memref<1x2048xf32, #tpu.memory_space<vmem>>, vector<1x2048xf32>
    %7 = vector.broadcast %6 : vector<1x2048xf32> to vector<104x2048xf32>
    %8 = arith.addf %5, %7 : vector<104x2048xf32>
    %c0_6 = arith.constant 0 : index
    %c0_7 = arith.constant 0 : index
    %9 = vector.load %arg6[%c0_6, %c0_7] : memref<104x1xf32, #tpu.memory_space<vmem>>, vector<104x1xf32>
    %cst_8 = arith.constant dense<0xFF800000> : vector<104xf32>
    %10 = vector.multi_reduction <maximumf>, %8, %cst_8 [1] : vector<104x2048xf32> to vector<104xf32>
    %11 = vector.shape_cast %10 : vector<104xf32> to vector<104x1xf32>
    %12 = arith.maximumf %9, %11 : vector<104x1xf32>
    %13 = arith.subf %9, %12 : vector<104x1xf32>
    %14 = math.exp %13 : vector<104x1xf32>
    %c0_9 = arith.constant 0 : index
    %c0_10 = arith.constant 0 : index
    %15 = vector.load %arg7[%c0_9, %c0_10] : memref<104x1xf32, #tpu.memory_space<vmem>>, vector<104x1xf32>
    %16 = arith.mulf %14, %15 : vector<104x1xf32>
    %17 = vector.broadcast %12 : vector<104x1xf32> to vector<104x2048xf32>
    %18 = arith.subf %8, %17 : vector<104x2048xf32>
    %19 = math.exp %18 : vector<104x2048xf32>
    %cst_11 = arith.constant dense<0.000000e+00> : vector<104xf32>
    %20 = vector.multi_reduction <add>, %19, %cst_11 [1] : vector<104x2048xf32> to vector<104xf32>
    %21 = vector.shape_cast %20 : vector<104xf32> to vector<104x1xf32>
    %22 = arith.addf %16, %21 : vector<104x1xf32>
    %c0_12 = arith.constant 0 : index
    %c0_13 = arith.constant 0 : index
    %23 = vector.load %arg7[%c0_12, %c0_13] : memref<104x1xf32, #tpu.memory_space<vmem>>, vector<104x1xf32>
    tpu.vector_store %arg7[%c0_12, %c0_13], %22 {strides = array<i32>} : memref<104x1xf32, #tpu.memory_space<vmem>>, vector<104x1xf32>,
    %c0_14 = arith.constant 0 : index
    %c0_15 = arith.constant 0 : index
    %24 = vector.load %arg6[%c0_14, %c0_15] : memref<104x1xf32, #tpu.memory_space<vmem>>, vector<104x1xf32>
    tpu.vector_store %arg6[%c0_14, %c0_15], %12 {strides = array<i32>} : memref<104x1xf32, #tpu.memory_space<vmem>>, vector<104x1xf32>,
    %c0_i32_16 = arith.constant 0 : i32
    %25 = arith.cmpi eq, %arg1, %c0_i32_16 : i32
    %26 = arith.extui %25 : i1 to i32
    %c0_i32_17 = arith.constant 0 : i32
    %27 = arith.cmpi ne, %26, %c0_i32_17 : i32
    scf.if %27 {
      %c0_18 = arith.constant 0 : index
      %c0_19 = arith.constant 0 : index
      %28 = vector.load %arg6[%c0_18, %c0_19] : memref<104x1xf32, #tpu.memory_space<vmem>>, vector<104x1xf32>
      %c0_20 = arith.constant 0 : index
      %c0_21 = arith.constant 0 : index
      %29 = vector.load %arg7[%c0_20, %c0_21] : memref<104x1xf32, #tpu.memory_space<vmem>>, vector<104x1xf32>
      %30 = math.log %29 : vector<104x1xf32>
      %31 = arith.addf %28, %30 : vector<104x1xf32>
      %32 = vector.shape_cast %31 : vector<104x1xf32> to vector<104x1xf32>
      %33 = vector.broadcast %32 : vector<104x1xf32> to vector<104x128xf32>
      %c0_22 = arith.constant 0 : index
      %c0_23 = arith.constant 0 : index
      %34 = vector.load %arg5[%c0_22, %c0_23] : memref<104x128xf32, #tpu.memory_space<vmem>>, vector<104x128xf32>
      tpu.vector_store %arg5[%c0_22, %c0_23], %33 {strides = array<i32>} : memref<104x128xf32, #tpu.memory_space<vmem>>, vector<104x128xf32>,
    } else {
    }
    return
  }
  func.func @transform_0(%arg0: i32, %arg1: i32) -> (i32, i32) {
    %c0_i32 = arith.constant 0 : i32
    %c0_i32_0 = arith.constant 0 : i32
    return %arg0, %c0_i32 : i32, i32
  }
  func.func @transform_1(%arg0: i32, %arg1: i32) -> (i32, i32) {
    %c0_i32 = arith.constant 0 : i32
    %c0_i32_0 = arith.constant 0 : i32
    return %c0_i32, %arg1 : i32, i32
  }
  func.func @transform_2(%arg0: i32, %arg1: i32) -> (i32, i32) {
    %c0_i32 = arith.constant 0 : i32
    %c0_i32_0 = arith.constant 0 : i32
    return %c0_i32, %arg1 : i32, i32
  }
  func.func @transform_3(%arg0: i32, %arg1: i32) -> (i32, i32) {
    %c0_i32 = arith.constant 0 : i32
    %c0_i32_0 = arith.constant 0 : i32
    return %arg0, %c0_i32 : i32, i32
  }
}

</mosaic_0001>

<llo_original>
// kernel: tpu_custom_call.1
$region0: #{tpu_custom_call.1}
  #allocation0 [shape = 'u32[]', space=smem, size = 0x4, offset = 0x4, fixed_abs, tag = 'smem constant byte address 0x4 - core index']
  #allocation1 [shape = 'u32[144,128]{1,0:T(1,128)}', space=vmem, size = 0x12000, scoped, tag = 'internal scratch']
  #allocation2 [shape = 'f32[104,1]{1,0:T(8,128)}', space=vmem, size = 0xd000, scoped, tag = 'scratch operand']
  #allocation3 [shape = 'f32[104,1]{1,0:T(8,128)}', space=vmem, size = 0xd000, scoped, tag = 'scratch operand']
  %s0 = inlined_call_operand.vmem [shape: f32[208,64], index: 0, kind: input, shape index: {}]
  %s1 = inlined_call_operand.hbm [shape: f32[64,2048], index: 1, kind: input, shape index: {}]
  %s2 = inlined_call_operand.vmem [shape: f32[1,2048], index: 2, kind: input, shape index: {}]
  %s3 = inlined_call_operand.hbm [shape: f32[208,128], index: 3, kind: output, shape index: {}]
  %s4 = sld [smem:[#allocation0]]
  $region57: #{tpu_custom_call.1} parent=0
    _
  %s6 = ssub.s32 1, %s4
  %s7 = scalar_select 0, %s6, %s4
  $region1: #{tpu_custom_call.1} parent=0
    #allocation4 [shape = 'u8[524288]{0}', space=vmem, size = 0x80000, scoped, tag = 'input window, operand 1, single buffered']
    #allocation5 [shape = 's32[2]{0}', space=sflag, size = 0x8, scoped, tag = 'scoped memory for tpu_custom_call.1']
    #allocation6 [shape = 's32[2]{0}', space=sflag, size = 0x8, scoped, tag = 'scoped memory for tpu_custom_call.1']
    #allocation7 [shape = 'u8[106496]{0}', space=vmem, size = 0x1a000, scoped, tag = 'output window, operand 0']
    %8 = vsyncpa [#allocation5], 0
    %9 = vsyncpa [#allocation6], 0
    %s10 = scalar_lea.sflag [#allocation6], 1
    %11 = vsyncpa %s10, 0
    loop: start=0, step=1, limit=4
    $region2: #{tpu_custom_call.1} parent=1 // loop_pre_header
      _
    $region3: #{tpu_custom_call.1} parent=1 // loop_header
      %s13 = sphi 0, %s17
      %p14 = scmp.ge.s32.totalorder %s13, 4
      %s20 = sphi 0, %s32
      %s21 = sphi 0, %s28
      %s22 = sphi 0, %s20
      %s23 = sphi 0, %s21
      %s24 = sphi 0, %s22
      %s25 = sphi 0, %s23
      %s35 = sphi 0, %s37
      %s38 = sphi 0, %s35
      %s39 = sphi 0, %s38
      %s55 = sphi 0, %s39
      %s61 = sphi 0, %s63
      %s64 = sphi 0, %s61
      %s65 = sphi 0, %s64
      %s81 = sphi 0, %s65
      %s87 = sphi 0, %s89
      %s90 = sphi 0, %s87
      %s91 = sphi 0, %s90
      %s107 = sphi 0, %s91
      %s113 = sphi 0, %s115
      %s116 = sphi 0, %s113
      %s117 = sphi 0, %s116
      %s133 = sphi 0, %s117
    $region4: #{tpu_custom_call.1} parent=1 // loop_header_branch
      %16 = sbr.rel (%p14) target = $region8
    $region5: #{tpu_custom_call.1} parent=1 // loop_body
      %s18 = ssub.s32 %s13, 1
      %s19 = ssub.s32 %s13, 2
      %s26 = sadd.s32 1, %s21
      %p27 = scmp.ge.s32.totalorder %s26, 1
      %s28 = scalar_select %p27, 0, %s26
      %s29 = sadd.s32 1, %s20
      %s30 = scalar_select %p27, %s29, %s20
      %p31 = scmp.ge.s32.totalorder %s30, 2
      %s32 = scalar_select %p31, 0, %s30
      %s33 = ssub.s32 %s20, %s32
      %p34 = scmp.eq.s32.totalorder %s33, 0
      %s36 = sadd.s32 %s35, 1
      %s37 = scalar_select %p34, %s35, %s36
      %p40 = pneg %p34
      %p41 = scmp.eq.s32.totalorder %s13, 1
      %p42 = por %p40, %p41
      %p43 = scmp.ne.s32.totalorder %s35, %s38
      %p44 = scmp.eq.s32.totalorder %s13, 0
      %p45 = por %p43, %p44
      %p46 = scmp.ne.s32.totalorder %s35, %s38
      %p47 = scmp.eq.s32.totalorder %s18, 1
      %p48 = por %p46, %p47
      %p49 = scmp.ne.s32.totalorder %s38, %s39
      %p50 = scmp.eq.s32.totalorder %s18, 0
      %p51 = por %p49, %p50
      %p52 = scmp.ne.s32.totalorder %s38, %s39
      %p53 = scmp.eq.s32.totalorder %s19, 1
      %p54 = por %p52, %p53
      %p56 = scmp.ne.s32.totalorder %s39, %s55
      %p57 = scmp.eq.s32.totalorder %s19, 0
      %p58 = por %p56, %p57
      %s59 = ssub.s32 %s21, %s28
      %p60 = scmp.eq.s32.totalorder %s59, 0
      %s62 = sadd.s32 %s61, 1
      %s63 = scalar_select %p60, %s61, %s62
      %p66 = pneg %p60
      %p67 = scmp.eq.s32.totalorder %s13, 1
      %p68 = por %p66, %p67
      %p69 = scmp.ne.s32.totalorder %s61, %s64
      %p70 = scmp.eq.s32.totalorder %s13, 0
      %p71 = por %p69, %p70
      %p72 = scmp.ne.s32.totalorder %s61, %s64
      %p73 = scmp.eq.s32.totalorder %s18, 1
      %p74 = por %p72, %p73
      %p75 = scmp.ne.s32.totalorder %s64, %s65
      %p76 = scmp.eq.s32.totalorder %s18, 0
      %p77 = por %p75, %p76
      %p78 = scmp.ne.s32.totalorder %s64, %s65
      %p79 = scmp.eq.s32.totalorder %s19, 1
      %p80 = por %p78, %p79
      %p82 = scmp.ne.s32.totalorder %s65, %s81
      %p83 = scmp.eq.s32.totalorder %s19, 0
      %p84 = por %p82, %p83
      %s85 = ssub.s32 %s21, %s28
      %p86 = scmp.eq.s32.totalorder %s85, 0
      %s88 = sadd.s32 %s87, 1
      %s89 = scalar_select %p86, %s87, %s88
      %p92 = pneg %p86
      %p93 = scmp.eq.s32.totalorder %s13, 1
      %p94 = por %p92, %p93
      %p95 = scmp.ne.s32.totalorder %s87, %s90
      %p96 = scmp.eq.s32.totalorder %s13, 0
      %p97 = por %p95, %p96
      %p98 = scmp.ne.s32.totalorder %s87, %s90
      %p99 = scmp.eq.s32.totalorder %s18, 1
      %p100 = por %p98, %p99
      %p101 = scmp.ne.s32.totalorder %s90, %s91
      %p102 = scmp.eq.s32.totalorder %s18, 0
      %p103 = por %p101, %p102
      %p104 = scmp.ne.s32.totalorder %s90, %s91
      %p105 = scmp.eq.s32.totalorder %s19, 1
      %p106 = por %p104, %p105
      %p108 = scmp.ne.s32.totalorder %s91, %s107
      %p109 = scmp.eq.s32.totalorder %s19, 0
      %p110 = por %p108, %p109
      %s111 = ssub.s32 %s20, %s32
      %p112 = scmp.eq.s32.totalorder %s111, 0
      %s114 = sadd.s32 %s113, 1
      %s115 = scalar_select %p112, %s113, %s114
      %p118 = pneg %p112
      %p119 = scmp.eq.s32.totalorder %s13, 1
      %p120 = por %p118, %p119
      %p121 = scmp.ne.s32.totalorder %s113, %s116
      %p122 = scmp.eq.s32.totalorder %s13, 0
      %p123 = por %p121, %p122
      %p124 = scmp.ne.s32.totalorder %s113, %s116
      %p125 = scmp.eq.s32.totalorder %s18, 1
      %p126 = por %p124, %p125
      %p127 = scmp.ne.s32.totalorder %s116, %s117
      %p128 = scmp.eq.s32.totalorder %s18, 0
      %p129 = por %p127, %p128
      %p130 = scmp.ne.s32.totalorder %s116, %s117
      %p131 = scmp.eq.s32.totalorder %s19, 1
      %p132 = por %p130, %p131
      %p134 = scmp.ne.s32.totalorder %s117, %s133
      %p135 = scmp.eq.s32.totalorder %s19, 0
      %p136 = por %p134, %p135
      %p137 = scmp.le.s32.totalorder 1, %s13
      %p138 = scmp.lt.s32.totalorder %s13, 3
      %p139 = pnand %p137, %p138
      %p140 = pneg %p139
      // Predicated region
      $region9: #{tpu_custom_call.1} parent=5 // pred_check
        _
      $region10: #{tpu_custom_call.1} parent=5 // pred_check_branch
        %142 = sbr.rel (%p139) target = $region12
      $region11: #{tpu_custom_call.1} parent=5 // pred_region
        %s143 = ssub.s32 %s13, 1
        // Predicated region
        $region13: #{tpu_custom_call.1} parent=11 // pred_check
          %p144 = pneg %p77
        $region14: #{tpu_custom_call.1} parent=11 // pred_check_branch
          %146 = sbr.rel (%p144) target = $region16
        $region15: #{tpu_custom_call.1} parent=11 // pred_region
          %s147 = smul.u32 16, %s23
          %s149 = ssub.s32 16384, 16384
          %150 = vsyncadd [#allocation5], %s149
          %s151 = smul.addr %s147, 128
          %s152 = scalar_lea.hbm %s1, %s151
          %s153 = sshll.u32 [#allocation4], 4
          %s154 = int_to_ptr.vmem [resolvable:$true] %s153
          %159 = dma.hbm_to_vmem [thread:$0]  %s152, 16384, %s154, [#allocation5], 2048, 2048, 128
        $region16: #{tpu_custom_call.1} parent=11 // pred_fallthru
          _
        // Predicated region
        $region17: #{tpu_custom_call.1} parent=11 // pred_check
          %p160 = pneg %p103
        $region18: #{tpu_custom_call.1} parent=11 // pred_check_branch
          %162 = sbr.rel (%p160) target = $region20
        $region19: #{tpu_custom_call.1} parent=11 // pred_region
          %s163 = smul.u32 16, %s23
          %p164 = scmp.lt.s32.totalorder %s163, 15
          %s165 = scalar_select %p164, %s163, 15
          %s166 = scalar_lea.vmem %s2, %s165
          %s167 = smul.u32 16, %s23
        $region20: #{tpu_custom_call.1} parent=11 // pred_fallthru
          _
      $region12: #{tpu_custom_call.1} parent=5 // pred_fallthru
        _
      %p168 = scmp.lt.s32.totalorder %s13, 2
      // Predicated region
      $region21: #{tpu_custom_call.1} parent=5 // pred_check
        %p169 = pneg %p168
      $region22: #{tpu_custom_call.1} parent=5 // pred_check_branch
        %171 = sbr.rel (%p169) target = $region24
      $region23: #{tpu_custom_call.1} parent=5 // pred_region
        // Predicated region
        $region25: #{tpu_custom_call.1} parent=23 // pred_check
          %p172 = pneg %p45
        $region26: #{tpu_custom_call.1} parent=23 // pred_check_branch
          %174 = sbr.rel (%p172) target = $region28
        $region27: #{tpu_custom_call.1} parent=23 // pred_region
          %s175 = smul.u32 13, %s20
          %p176 = scmp.lt.s32.totalorder %s175, 25
          %s177 = scalar_select %p176, %s175, 25
          %s178 = smul.addr %s177, 8
          %s179 = scalar_lea.vmem %s0, %s178
          %s180 = smul.u32 13, %s20
        $region28: #{tpu_custom_call.1} parent=23 // pred_fallthru
          _
      $region24: #{tpu_custom_call.1} parent=5 // pred_fallthru
        _
      %p181 = scmp.le.s32.totalorder 1, %s13
      %p182 = scmp.lt.s32.totalorder %s13, 3
      %p183 = pnand %p181, %p182
      %p184 = pneg %p183
      // Predicated region
      $region29: #{tpu_custom_call.1} parent=5 // pred_check
        _
      $region30: #{tpu_custom_call.1} parent=5 // pred_check_branch
        %186 = sbr.rel (%p183) target = $region32
      $region31: #{tpu_custom_call.1} parent=5 // pred_region
        %s187 = ssub.s32 %s13, 1
        // Predicated region
        $region33: #{tpu_custom_call.1} parent=31 // pred_check
          %p188 = pneg %p77
        $region34: #{tpu_custom_call.1} parent=31 // pred_check_branch
          %190 = sbr.rel (%p188) target = $region36
        $region35: #{tpu_custom_call.1} parent=31 // pred_region
          %191 = dma.done [#allocation5], 16384
        $region36: #{tpu_custom_call.1} parent=31 // pred_fallthru
          _
        %s192 = smul.u32 13, %s22
        %p193 = scmp.lt.s32.totalorder %s192, 25
        %s194 = scalar_select %p193, %s192, 25
        %s195 = smul.addr %s194, 8
        %s196 = scalar_lea.vmem %s0, %s195
        %p197 = pneg %p51
        %p198 = pneg %p48
        %p199 = pneg %p77
        %p200 = pneg %p74
        %s201 = smul.u32 16, %s23
        %p202 = scmp.lt.s32.totalorder %s201, 15
        %s203 = scalar_select %p202, %s201, 15
        %s204 = scalar_lea.vmem %s2, %s203
        %p205 = pneg %p103
        %p206 = pneg %p100
        %p207 = pneg %p129
        %p208 = pneg %p126
        %s209 = sand.u32 %s116, 1
        %s210 = scalar_lea.sflag [#allocation6], %s209
        %s211 = sand.u32 %s116, 1
        %s212 = smul.addr %s211, 104
        %s213 = scalar_lea.vmem [#allocation7], %s212
        %s214 = smul.u32 13, %s22
        %p215 = scmp.lt.s32.totalorder %s214, 25
        %s216 = scalar_select %p215, %s214, 25
        %s217 = smul.addr %s216, 8
        %s218 = scalar_lea.vmem %s0, %s217
        %s219 = smul.u32 13, %s22
        %s220 = smul.u32 16, %s23
        %s221 = smul.u32 16, %s23
        %p222 = scmp.lt.s32.totalorder %s221, 15
        %s223 = scalar_select %p222, %s221, 15
        %s224 = scalar_lea.vmem %s2, %s223
        %s225 = smul.u32 16, %s23
        %s226 = smul.u32 13, %s22
        %p227 = scmp.eq.s32.totalorder %s23, 0
        // Predicated region
        $region37: #{tpu_custom_call.1} parent=31 // pred_check
          %p228 = pneg %p227
        $region38: #{tpu_custom_call.1} parent=31 // pred_check_branch
          %230 = sbr.rel (%p228) target = $region40
        $region39: #{tpu_custom_call.1} parent=31 // pred_region
          %vm231 = vcmask 7168
          %232 = vst.msk [vmem:[#allocation2] sm:$0xff] %vm231, -1e+30
          %233 = vst.msk [vmem:[#allocation2 + $0x8] sm:$0xff] %vm231, -1e+30
          %234 = vst.msk [vmem:[#allocation2 + $0x10] sm:$0xff] %vm231, -1e+30
          %235 = vst.msk [vmem:[#allocation2 + $0x18] sm:$0xff] %vm231, -1e+30
          %236 = vst.msk [vmem:[#allocation2 + $0x20] sm:$0xff] %vm231, -1e+30
          %237 = vst.msk [vmem:[#allocation2 + $0x28] sm:$0xff] %vm231, -1e+30
          %238 = vst.msk [vmem:[#allocation2 + $0x30] sm:$0xff] %vm231, -1e+30
          %239 = vst.msk [vmem:[#allocation2 + $0x38] sm:$0xff] %vm231, -1e+30
          %240 = vst.msk [vmem:[#allocation2 + $0x40] sm:$0xff] %vm231, -1e+30
          %241 = vst.msk [vmem:[#allocation2 + $0x48] sm:$0xff] %vm231, -1e+30
          %242 = vst.msk [vmem:[#allocation2 + $0x50] sm:$0xff] %vm231, -1e+30
          %243 = vst.msk [vmem:[#allocation2 + $0x58] sm:$0xff] %vm231, -1e+30
          %244 = vst.msk [vmem:[#allocation2 + $0x60] sm:$0xff] %vm231, -1e+30
          %245 = vst.msk [vmem:[#allocation3] sm:$0xff] %vm231, 0.0
          %246 = vst.msk [vmem:[#allocation3 + $0x8] sm:$0xff] %vm231, 0.0
          %247 = vst.msk [vmem:[#allocation3 + $0x10] sm:$0xff] %vm231, 0.0
          %248 = vst.msk [vmem:[#allocation3 + $0x18] sm:$0xff] %vm231, 0.0
          %249 = vst.msk [vmem:[#allocation3 + $0x20] sm:$0xff] %vm231, 0.0
          %250 = vst.msk [vmem:[#allocation3 + $0x28] sm:$0xff] %vm231, 0.0
          %251 = vst.msk [vmem:[#allocation3 + $0x30] sm:$0xff] %vm231, 0.0
          %252 = vst.msk [vmem:[#allocation3 + $0x38] sm:$0xff] %vm231, 0.0
          %253 = vst.msk [vmem:[#allocation3 + $0x40] sm:$0xff] %vm231, 0.0
          %254 = vst.msk [vmem:[#allocation3 + $0x48] sm:$0xff] %vm231, 0.0
          %255 = vst.msk [vmem:[#allocation3 + $0x50] sm:$0xff] %vm231, 0.0
          %256 = vst.msk [vmem:[#allocation3 + $0x58] sm:$0xff] %vm231, 0.0
          %257 = vst.msk [vmem:[#allocation3 + $0x60] sm:$0xff] %vm231, 0.0
        $region40: #{tpu_custom_call.1} parent=31 // pred_fallthru
          _
        %v258 = vld [vmem:[%s218] sm:$0xff]
        %v259 = vld [vmem:[%s218 + $0x8] sm:$0xff]
        %v260 = vld [vmem:[%s218 + $0x10] sm:$0xff]
        %v261 = vld [vmem:[%s218 + $0x18] sm:$0xff]
        %v262 = vld [vmem:[%s218 + $0x20] sm:$0xff]
        %v263 = vld [vmem:[%s218 + $0x28] sm:$0xff]
        %v264 = vld [vmem:[%s218 + $0x30] sm:$0xff]
        %v265 = vld [vmem:[%s218 + $0x38] sm:$0xff]
        %v266 = vld [vmem:[%s218 + $0x40] sm:$0xff]
        %v267 = vld [vmem:[%s218 + $0x48] sm:$0xff]
        %v268 = vld [vmem:[%s218 + $0x50] sm:$0xff]
        %v269 = vld [vmem:[%s218 + $0x58] sm:$0xff]
        %v270 = vld [vmem:[%s218 + $0x60] sm:$0xff]
        %v271 = vld [vmem:[#allocation4] sm:$0xff]
        %v272 = vld [vmem:[#allocation4 + $0x8] sm:$0xff]
        %v273 = vld [vmem:[#allocation4 + $0x10] sm:$0xff]
        %v274 = vld [vmem:[#allocation4 + $0x18] sm:$0xff]
        %v275 = vld [vmem:[#allocation4 + $0x20] sm:$0xff]
        %v276 = vld [vmem:[#allocation4 + $0x28] sm:$0xff]
        %v277 = vld [vmem:[#allocation4 + $0x30] sm:$0xff]
        %v278 = vld [vmem:[#allocation4 + $0x38] sm:$0xff]
        %v279 = vld [vmem:[#allocation4 + $0x40] sm:$0xff]
        %v280 = vld [vmem:[#allocation4 + $0x48] sm:$0xff]
        %v281 = vld [vmem:[#allocation4 + $0x50] sm:$0xff]
        %v282 = vld [vmem:[#allocation4 + $0x58] sm:$0xff]
        %v283 = vld [vmem:[#allocation4 + $0x60] sm:$0xff]
        %v284 = vld [vmem:[#allocation4 + $0x68] sm:$0xff]
        %v285 = vld [vmem:[#allocation4 + $0x70] sm:$0xff]
        %v286 = vld [vmem:[#allocation4 + $0x78] sm:$0xff]
        %v287 = vld [vmem:[#allocation4 + $0x80] sm:$0xff]
        %v288 = vld [vmem:[#allocation4 + $0x88] sm:$0xff]
        %v289 = vld [vmem:[#allocation4 + $0x90] sm:$0xff]
        %v290 = vld [vmem:[#allocation4 + $0x98] sm:$0xff]
        %v291 = vld [vmem:[#allocation4 + $0xa0] sm:$0xff]
        %v292 = vld [vmem:[#allocation4 + $0xa8] sm:$0xff]
        %v293 = vld [vmem:[#allocation4 + $0xb0] sm:$0xff]
        %v294 = vld [vmem:[#allocation4 + $0xb8] sm:$0xff]
        %v295 = vld [vmem:[#allocation4 + $0xc0] sm:$0xff]
        %v296 = vld [vmem:[#allocation4 + $0xc8] sm:$0xff]
        %v297 = vld [vmem:[#allocation4 + $0xd0] sm:$0xff]
        %v298 = vld [vmem:[#allocation4 + $0xd8] sm:$0xff]
        %v299 = vld [vmem:[#allocation4 + $0xe0] sm:$0xff]
        %v300 = vld [vmem:[#allocation4 + $0xe8] sm:$0xff]
        %v301 = vld [vmem:[#allocation4 + $0xf0] sm:$0xff]
        %v302 = vld [vmem:[#allocation4 + $0xf8] sm:$0xff]
        %v303 = vld [vmem:[#allocation4 + $0x100] sm:$0xff]
        %v304 = vld [vmem:[#allocation4 + $0x108] sm:$0xff]
        %v305 = vld [vmem:[#allocation4 + $0x110] sm:$0xff]
        %v306 = vld [vmem:[#allocation4 + $0x118] sm:$0xff]
        %v307 = vld [vmem:[#allocation4 + $0x120] sm:$0xff]
        %v308 = vld [vmem:[#allocation4 + $0x128] sm:$0xff]
        %v309 = vld [vmem:[#allocation4 + $0x130] sm:$0xff]
        %v310 = vld [vmem:[#allocation4 + $0x138] sm:$0xff]
        %v311 = vld [vmem:[#allocation4 + $0x140] sm:$0xff]
        %v312 = vld [vmem:[#allocation4 + $0x148] sm:$0xff]
        %v313 = vld [vmem:[#allocation4 + $0x150] sm:$0xff]
        %v314 = vld [vmem:[#allocation4 + $0x158] sm:$0xff]
        %v315 = vld [vmem:[#allocation4 + $0x160] sm:$0xff]
        %v316 = vld [vmem:[#allocation4 + $0x168] sm:$0xff]
        %v317 = vld [vmem:[#allocation4 + $0x170] sm:$0xff]
        %v318 = vld [vmem:[#allocation4 + $0x178] sm:$0xff]
        %v319 = vld [vmem:[#allocation4 + $0x180] sm:$0xff]
        %v320 = vld [vmem:[#allocation4 + $0x188] sm:$0xff]
        %v321 = vld [vmem:[#allocation4 + $0x190] sm:$0xff]
        %v322 = vld [vmem:[#allocation4 + $0x198] sm:$0xff]
        %v323 = vld [vmem:[#allocation4 + $0x1a0] sm:$0xff]
        %v324 = vld [vmem:[#allocation4 + $0x1a8] sm:$0xff]
        %v325 = vld [vmem:[#allocation4 + $0x1b0] sm:$0xff]
        %v326 = vld [vmem:[#allocation4 + $0x1b8] sm:$0xff]
        %v327 = vld [vmem:[#allocation4 + $0x1c0] sm:$0xff]
        %v328 = vld [vmem:[#allocation4 + $0x1c8] sm:$0xff]
        %v329 = vld [vmem:[#allocation4 + $0x1d0] sm:$0xff]
        %v330 = vld [vmem:[#allocation4 + $0x1d8] sm:$0xff]
        %v331 = vld [vmem:[#allocation4 + $0x1e0] sm:$0xff]
        %v332 = vld [vmem:[#allocation4 + $0x1e8] sm:$0xff]
        %v333 = vld [vmem:[#allocation4 + $0x1f0] sm:$0xff]
        %v334 = vld [vmem:[#allocation4 + $0x1f8] sm:$0xff]
        %v335 = vld [vmem:[#allocation4 + $0x200] sm:$0xff]
        %v336 = vld [vmem:[#allocation4 + $0x208] sm:$0xff]
        %v337 = vld [vmem:[#allocation4 + $0x210] sm:$0xff]
        %v338 = vld [vmem:[#allocation4 + $0x218] sm:$0xff]
        %v339 = vld [vmem:[#allocation4 + $0x220] sm:$0xff]
        %v340 = vld [vmem:[#allocation4 + $0x228] sm:$0xff]
        %v341 = vld [vmem:[#allocation4 + $0x230] sm:$0xff]
        %v342 = vld [vmem:[#allocation4 + $0x238] sm:$0xff]
        %v343 = vld [vmem:[#allocation4 + $0x240] sm:$0xff]
        %v344 = vld [vmem:[#allocation4 + $0x248] sm:$0xff]
        %v345 = vld [vmem:[#allocation4 + $0x250] sm:$0xff]
        %v346 = vld [vmem:[#allocation4 + $0x258] sm:$0xff]
        %v347 = vld [vmem:[#allocation4 + $0x260] sm:$0xff]
        %v348 = vld [vmem:[#allocation4 + $0x268] sm:$0xff]
        %v349 = vld [vmem:[#allocation4 + $0x270] sm:$0xff]
        %v350 = vld [vmem:[#allocation4 + $0x278] sm:$0xff]
        %v351 = vld [vmem:[#allocation4 + $0x280] sm:$0xff]
        %v352 = vld [vmem:[#allocation4 + $0x288] sm:$0xff]
        %v353 = vld [vmem:[#allocation4 + $0x290] sm:$0xff]
        %v354 = vld [vmem:[#allocation4 + $0x298] sm:$0xff]
        %v355 = vld [vmem:[#allocation4 + $0x2a0] sm:$0xff]
        %v356 = vld [vmem:[#allocation4 + $0x2a8] sm:$0xff]
        %v357 = vld [vmem:[#allocation4 + $0x2b0] sm:$0xff]
        %v358 = vld [vmem:[#allocation4 + $0x2b8] sm:$0xff]
        %v359 = vld [vmem:[#allocation4 + $0x2c0] sm:$0xff]
        %v360 = vld [vmem:[#allocation4 + $0x2c8] sm:$0xff]
        %v361 = vld [vmem:[#allocation4 + $0x2d0] sm:$0xff]
        %v362 = vld [vmem:[#allocation4 + $0x2d8] sm:$0xff]
        %v363 = vld [vmem:[#allocation4 + $0x2e0] sm:$0xff]
        %v364 = vld [vmem:[#allocation4 + $0x2e8] sm:$0xff]
        %v365 = vld [vmem:[#allocation4 + $0x2f0] sm:$0xff]
        %v366 = vld [vmem:[#allocation4 + $0x2f8] sm:$0xff]
        %v367 = vld [vmem:[#allocation4 + $0x300] sm:$0xff]
        %v368 = vld [vmem:[#allocation4 + $0x308] sm:$0xff]
        %v369 = vld [vmem:[#allocation4 + $0x310] sm:$0xff]
        %v370 = vld [vmem:[#allocation4 + $0x318] sm:$0xff]
        %v371 = vld [vmem:[#allocation4 + $0x320] sm:$0xff]
        %v372 = vld [vmem:[#allocation4 + $0x328] sm:$0xff]
        %v373 = vld [vmem:[#allocation4 + $0x330] sm:$0xff]
        %v374 = vld [vmem:[#allocation4 + $0x338] sm:$0xff]
        %v375 = vld [vmem:[#allocation4 + $0x340] sm:$0xff]
        %v376 = vld [vmem:[#allocation4 + $0x348] sm:$0xff]
        %v377 = vld [vmem:[#allocation4 + $0x350] sm:$0xff]
        %v378 = vld [vmem:[#allocation4 + $0x358] sm:$0xff]
        %v379 = vld [vmem:[#allocation4 + $0x360] sm:$0xff]
        %v380 = vld [vmem:[#allocation4 + $0x368] sm:$0xff]
        %v381 = vld [vmem:[#allocation4 + $0x370] sm:$0xff]
        %v382 = vld [vmem:[#allocation4 + $0x378] sm:$0xff]
        %v383 = vld [vmem:[#allocation4 + $0x380] sm:$0xff]
        %v384 = vld [vmem:[#allocation4 + $0x388] sm:$0xff]
        %v385 = vld [vmem:[#allocation4 + $0x390] sm:$0xff]
        %v386 = vld [vmem:[#allocation4 + $0x398] sm:$0xff]
        %v387 = vld [vmem:[#allocation4 + $0x3a0] sm:$0xff]
        %v388 = vld [vmem:[#allocation4 + $0x3a8] sm:$0xff]
        %v389 = vld [vmem:[#allocation4 + $0x3b0] sm:$0xff]
        %v390 = vld [vmem:[#allocation4 + $0x3b8] sm:$0xff]
        %v391 = vld [vmem:[#allocation4 + $0x3c0] sm:$0xff]
        %v392 = vld [vmem:[#allocation4 + $0x3c8] sm:$0xff]
        %v393 = vld [vmem:[#allocation4 + $0x3d0] sm:$0xff]
        %v394 = vld [vmem:[#allocation4 + $0x3d8] sm:$0xff]
        %v395 = vld [vmem:[#allocation4 + $0x3e0] sm:$0xff]
        %v396 = vld [vmem:[#allocation4 + $0x3e8] sm:$0xff]
        %v397 = vld [vmem:[#allocation4 + $0x3f0] sm:$0xff]
        %v398 = vld [vmem:[#allocation4 + $0x3f8] sm:$0xff]
        %v399 = vld [vmem:[%s224] sm:$0xff]
        %v400 = vld [vmem:[%s224 + $0x8] sm:$0xff]
        %v403 = vlaneseq
        %v404 = vshrl.u32 %v403, 7
        %v405 = vsub.s32 0, %v404
        %v406 = vrot.slane %v399, %v405
        %v407 = vlaneseq
        %v408 = vshrl.u32 %v407, 7
        %v409 = vsub.s32 1, %v408
        %v410 = vrot.slane %v399, %v409
        %v411 = vlaneseq
        %v412 = vshrl.u32 %v411, 7
        %v413 = vsub.s32 2, %v412
        %v414 = vrot.slane %v399, %v413
        %v415 = vlaneseq
        %v416 = vshrl.u32 %v415, 7
        %v417 = vsub.s32 3, %v416
        %v418 = vrot.slane %v399, %v417
        %v419 = vlaneseq
        %v420 = vshrl.u32 %v419, 7
        %v421 = vsub.s32 4, %v420
        %v422 = vrot.slane %v399, %v421
        %v423 = vlaneseq
        %v424 = vshrl.u32 %v423, 7
        %v425 = vsub.s32 5, %v424
        %v426 = vrot.slane %v399, %v425
        %v427 = vlaneseq
        %v428 = vshrl.u32 %v427, 7
        %v429 = vsub.s32 6, %v428
        %v430 = vrot.slane %v399, %v429
        %v431 = vlaneseq
        %v432 = vshrl.u32 %v431, 7
        %v433 = vsub.s32 7, %v432
        %v434 = vrot.slane %v399, %v433
        %v435 = vlaneseq
        %v436 = vshrl.u32 %v435, 7
        %v437 = vsub.s32 0, %v436
        %v438 = vrot.slane %v400, %v437
        %v439 = vlaneseq
        %v440 = vshrl.u32 %v439, 7
        %v441 = vsub.s32 1, %v440
        %v442 = vrot.slane %v400, %v441
        %v443 = vlaneseq
        %v444 = vshrl.u32 %v443, 7
        %v445 = vsub.s32 2, %v444
        %v446 = vrot.slane %v400, %v445
        %v447 = vlaneseq
        %v448 = vshrl.u32 %v447, 7
        %v449 = vsub.s32 3, %v448
        %v450 = vrot.slane %v400, %v449
        %v451 = vlaneseq
        %v452 = vshrl.u32 %v451, 7
        %v453 = vsub.s32 4, %v452
        %v454 = vrot.slane %v400, %v453
        %v455 = vlaneseq
        %v456 = vshrl.u32 %v455, 7
        %v457 = vsub.s32 5, %v456
        %v458 = vrot.slane %v400, %v457
        %v459 = vlaneseq
        %v460 = vshrl.u32 %v459, 7
        %v461 = vsub.s32 6, %v460
        %v462 = vrot.slane %v400, %v461
        %v463 = vlaneseq
        %v464 = vshrl.u32 %v463, 7
        %v465 = vsub.s32 7, %v464
        %v466 = vrot.slane %v400, %v465
        %vm483 = vcmask 523264
        %v485 = vsel %vm483, %v258, 0
        %v488 = vsel %vm483, %v259, 0
        %v491 = vsel %vm483, %v260, 0
        %v494 = vsel %vm483, %v261, 0
        %v497 = vsel %vm483, %v262, 0
        %v500 = vsel %vm483, %v263, 0
        %v503 = vsel %vm483, %v264, 0
        %v506 = vsel %vm483, %v265, 0
        %v509 = vsel %vm483, %v266, 0
        %v512 = vsel %vm483, %v267, 0
        %v515 = vsel %vm483, %v268, 0
        %v518 = vsel %vm483, %v269, 0
        %v521 = vsel %vm483, %v270, 0
        %523 = vmatprep.subr.mxu0 0.0
        %524 = vmatpush1.msra.mxu0 0.0
        %525 = vmatprep.subr.mxu0 0.0
        %526 = vmatpush1.msra.mxu0 0.0
        %527 = vmatprep.subr.mxu0 0.0
        %528 = vmatpush1.msra.mxu0 0.0
        %529 = vmatprep.subr.mxu0 0.0
        %530 = vmatpush1.msra.mxu0 0.0
        %531 = vmatprep.subr.mxu0 0.0
        %532 = vmatpush1.msra.mxu0 0.0
        %533 = vmatprep.subr.mxu0 0.0
        %534 = vmatpush1.msra.mxu0 0.0
        %535 = vmatprep.subr.mxu0 0.0
        %536 = vmatpush1.msra.mxu0 0.0
        %537 = vmatprep.subr.mxu0 0.0
        %538 = vmatpush1.msra.mxu0 0.0
        %539 = vmatprep.subr.mxu0 %v384
        %540 = vmatpush1.msra.mxu0 %v383
        %541 = vmatprep.subr.mxu0 %v368
        %542 = vmatpush1.msra.mxu0 %v367
        %543 = vmatprep.subr.mxu0 %v352
        %544 = vmatpush1.msra.mxu0 %v351
        %545 = vmatprep.subr.mxu0 %v336
        %546 = vmatpush1.msra.mxu0 %v335
        %547 = vmatprep.subr.mxu0 %v320
        %548 = vmatpush1.msra.mxu0 %v319
        %549 = vmatprep.subr.mxu0 %v304
        %550 = vmatpush1.msra.mxu0 %v303
        %551 = vmatprep.subr.mxu0 %v288
        %552 = vmatpush1.msra.mxu0 %v287
        %553 = vmatprep.subr.mxu0 %v272
        %554 = vmatpush1.msra.mxu0 %v271
        %555 = vmatprep.subr.mxu0 0.0
        %556 = vmatpush2.msra.mxu0 0.0
        %557 = vmatprep.subr.mxu0 0.0
        %558 = vmatpush2.msra.mxu0 0.0
        %559 = vmatprep.subr.mxu0 0.0
        %560 = vmatpush2.msra.mxu0 0.0
        %561 = vmatprep.subr.mxu0 0.0
        %562 = vmatpush2.msra.mxu0 0.0
        %563 = vmatprep.subr.mxu0 0.0
        %564 = vmatpush2.msra.mxu0 0.0
        %565 = vmatprep.subr.mxu0 0.0
        %566 = vmatpush2.msra.mxu0 0.0
        %567 = vmatprep.subr.mxu0 0.0
        %568 = vmatpush2.msra.mxu0 0.0
        %569 = vmatprep.subr.mxu0 0.0
        %570 = vmatpush2.msra.mxu0 0.0
        %571 = vmatprep.subr.mxu0 0.0
        %572 = vmatpush2.msra.mxu0 0.0
        %573 = vmatprep.subr.mxu0 0.0
        %574 = vmatpush2.msra.mxu0 0.0
        %575 = vmatprep.subr.mxu0 0.0
        %576 = vmatpush2.msra.mxu0 0.0
        %577 = vmatprep.subr.mxu0 0.0
        %578 = vmatpush2.msra.mxu0 0.0
        %579 = vmatprep.subr.mxu0 0.0
        %580 = vmatpush2.msra.mxu0 0.0
        %581 = vmatprep.subr.mxu0 0.0
        %582 = vmatpush2.msra.mxu0 0.0
        %583 = vmatprep.subr.mxu0 0.0
        %584 = vmatpush2.msra.mxu0 0.0
        %585 = vmatprep.subr.mxu0 0.0
        %586 = vmatpush2.msra.mxu0 0.0
        %587 = vmatprep.mubr.f32.mxu0 0.0
        %588 = vmatmul.mubr.f32.gmra.mxu0 %v485
        %v589 = vpop.f32.mrf.mxu0
        %v590 = vadd.f32 %v406, %v589
        %v591 = vpop.f32.mrf.mxu0
        %v592 = vadd.f32 %v410, %v591
        %593 = vmatprep.mubr.f32.mxu0 0.0
        %594 = vmatmul.mubr.f32.gmra.mxu0 %v488
        %v595 = vpop.f32.mrf.mxu0
        %v596 = vadd.f32 %v406, %v595
        %v597 = vpop.f32.mrf.mxu0
        %v598 = vadd.f32 %v410, %v597
        %599 = vmatprep.mubr.f32.mxu0 0.0
        %600 = vmatmul.mubr.f32.gmra.mxu0 %v491
        %v601 = vpop.f32.mrf.mxu0
        %v602 = vadd.f32 %v406, %v601
        %v603 = vpop.f32.mrf.mxu0
        %v604 = vadd.f32 %v410, %v603
        %605 = vmatprep.mubr.f32.mxu0 0.0
        %606 = vmatmul.mubr.f32.gmra.mxu0 %v494
        %v607 = vpop.f32.mrf.mxu0
        %v608 = vadd.f32 %v406, %v607
        %v609 = vpop.f32.mrf.mxu0
        %v610 = vadd.f32 %v410, %v609
        %611 = vmatprep.mubr.f32.mxu0 0.0
        %612 = vmatmul.mubr.f32.gmra.mxu0 %v497
        %v613 = vpop.f32.mrf.mxu0
        %v614 = vadd.f32 %v406, %v613
        %v615 = vpop.f32.mrf.mxu0
        %v616 = vadd.f32 %v410, %v615
        %617 = vmatprep.mubr.f32.mxu0 0.0
        %618 = vmatmul.mubr.f32.gmra.mxu0 %v500
        %v619 = vpop.f32.mrf.mxu0
        %v620 = vadd.f32 %v406, %v619
        %v621 = vpop.f32.mrf.mxu0
        %v622 = vadd.f32 %v410, %v621
        %623 = vmatprep.mubr.f32.mxu0 0.0
        %624 = vmatmul.mubr.f32.gmra.mxu0 %v503
        %v625 = vpop.f32.mrf.mxu0
        %v626 = vadd.f32 %v406, %v625
        %v627 = vpop.f32.mrf.mxu0
        %v628 = vadd.f32 %v410, %v627
        %629 = vmatprep.mubr.f32.mxu0 0.0
        %630 = vmatmul.mubr.f32.gmra.mxu0 %v506
        %v631 = vpop.f32.mrf.mxu0
        %v632 = vadd.f32 %v406, %v631
        %v633 = vpop.f32.mrf.mxu0
        %v634 = vadd.f32 %v410, %v633
        %635 = vmatprep.mubr.f32.mxu0 0.0
        %636 = vmatmul.mubr.f32.gmra.mxu0 %v509
        %v637 = vpop.f32.mrf.mxu0
        %v638 = vadd.f32 %v406, %v637
        %v639 = vpop.f32.mrf.mxu0
        %v640 = vadd.f32 %v410, %v639
        %641 = vmatprep.mubr.f32.mxu0 0.0
        %642 = vmatmul.mubr.f32.gmra.mxu0 %v512
        %v643 = vpop.f32.mrf.mxu0
        %v644 = vadd.f32 %v406, %v643
        %v645 = vpop.f32.mrf.mxu0
        %v646 = vadd.f32 %v410, %v645
        %647 = vmatprep.mubr.f32.mxu0 0.0
        %648 = vmatmul.mubr.f32.gmra.mxu0 %v515
        %v649 = vpop.f32.mrf.mxu0
        %v650 = vadd.f32 %v406, %v649
        %v651 = vpop.f32.mrf.mxu0
        %v652 = vadd.f32 %v410, %v651
        %653 = vmatprep.mubr.f32.mxu0 0.0
        %654 = vmatmul.mubr.f32.gmra.mxu0 %v518
        %v655 = vpop.f32.mrf.mxu0
        %v656 = vadd.f32 %v406, %v655
        %v657 = vpop.f32.mrf.mxu0
        %v658 = vadd.f32 %v410, %v657
        %659 = vmatprep.mubr.f32.mxu0 0.0
        %660 = vmatmul.mubr.f32.gmra.mxu0 %v521
        %v661 = vpop.f32.mrf.mxu0
        %v662 = vadd.f32 %v406, %v661
        %v663 = vpop.f32.mrf.mxu0
        %v664 = vadd.f32 %v410, %v663
        %665 = vdwg.mxu0
        %666 = vmatprep.subr.mxu0 0.0
        %667 = vmatpush1.msra.mxu0 0.0
        %668 = vmatprep.subr.mxu0 0.0
        %669 = vmatpush1.msra.mxu0 0.0
        %670 = vmatprep.subr.mxu0 0.0
        %671 = vmatpush1.msra.mxu0 0.0
        %672 = vmatprep.subr.mxu0 0.0
        %673 = vmatpush1.msra.mxu0 0.0
        %674 = vmatprep.subr.mxu0 0.0
        %675 = vmatpush1.msra.mxu0 0.0
        %676 = vmatprep.subr.mxu0 0.0
        %677 = vmatpush1.msra.mxu0 0.0
        %678 = vmatprep.subr.mxu0 0.0
        %679 = vmatpush1.msra.mxu0 0.0
        %680 = vmatprep.subr.mxu0 0.0
        %681 = vmatpush1.msra.mxu0 0.0
        %682 = vmatprep.subr.mxu0 %v386
        %683 = vmatpush1.msra.mxu0 %v385
        %684 = vmatprep.subr.mxu0 %v370
        %685 = vmatpush1.msra.mxu0 %v369
        %686 = vmatprep.subr.mxu0 %v354
        %687 = vmatpush1.msra.mxu0 %v353
        %688 = vmatprep.subr.mxu0 %v338
        %689 = vmatpush1.msra.mxu0 %v337
        %690 = vmatprep.subr.mxu0 %v322
        %691 = vmatpush1.msra.mxu0 %v321
        %692 = vmatprep.subr.mxu0 %v306
        %693 = vmatpush1.msra.mxu0 %v305
        %694 = vmatprep.subr.mxu0 %v290
        %695 = vmatpush1.msra.mxu0 %v289
        %696 = vmatprep.subr.mxu0 %v274
        %697 = vmatpush1.msra.mxu0 %v273
        %698 = vmatprep.subr.mxu0 0.0
        %699 = vmatpush2.msra.mxu0 0.0
        %700 = vmatprep.subr.mxu0 0.0
        %701 = vmatpush2.msra.mxu0 0.0
        %702 = vmatprep.subr.mxu0 0.0
        %703 = vmatpush2.msra.mxu0 0.0
        %704 = vmatprep.subr.mxu0 0.0
        %705 = vmatpush2.msra.mxu0 0.0
        %706 = vmatprep.subr.mxu0 0.0
        %707 = vmatpush2.msra.mxu0 0.0
        %708 = vmatprep.subr.mxu0 0.0
        %709 = vmatpush2.msra.mxu0 0.0
        %710 = vmatprep.subr.mxu0 0.0
        %711 = vmatpush2.msra.mxu0 0.0
        %712 = vmatprep.subr.mxu0 0.0
        %713 = vmatpush2.msra.mxu0 0.0
        %714 = vmatprep.subr.mxu0 0.0
        %715 = vmatpush2.msra.mxu0 0.0
        %716 = vmatprep.subr.mxu0 0.0
        %717 = vmatpush2.msra.mxu0 0.0
        %718 = vmatprep.subr.mxu0 0.0
        %719 = vmatpush2.msra.mxu0 0.0
        %720 = vmatprep.subr.mxu0 0.0
        %721 = vmatpush2.msra.mxu0 0.0
        %722 = vmatprep.subr.mxu0 0.0
        %723 = vmatpush2.msra.mxu0 0.0
        %724 = vmatprep.subr.mxu0 0.0
        %725 = vmatpush2.msra.mxu0 0.0
        %726 = vmatprep.subr.mxu0 0.0
        %727 = vmatpush2.msra.mxu0 0.0
        %728 = vmatprep.subr.mxu0 0.0
        %729 = vmatpush2.msra.mxu0 0.0
        %730 = vmatprep.mubr.f32.mxu0 0.0
        %731 = vmatmul.mubr.f32.gmra.mxu0 %v485
        %v732 = vpop.f32.mrf.mxu0
        %v733 = vadd.f32 %v414, %v732
        %v734 = vpop.f32.mrf.mxu0
        %v735 = vadd.f32 %v418, %v734
        %736 = vmatprep.mubr.f32.mxu0 0.0
        %737 = vmatmul.mubr.f32.gmra.mxu0 %v488
        %v738 = vpop.f32.mrf.mxu0
        %v739 = vadd.f32 %v414, %v738
        %v740 = vpop.f32.mrf.mxu0
        %v741 = vadd.f32 %v418, %v740
        %742 = vmatprep.mubr.f32.mxu0 0.0
        %743 = vmatmul.mubr.f32.gmra.mxu0 %v491
        %v744 = vpop.f32.mrf.mxu0
        %v745 = vadd.f32 %v414, %v744
        %v746 = vpop.f32.mrf.mxu0
        %v747 = vadd.f32 %v418, %v746
        %748 = vmatprep.mubr.f32.mxu0 0.0
        %749 = vmatmul.mubr.f32.gmra.mxu0 %v494
        %v750 = vpop.f32.mrf.mxu0
        %v751 = vadd.f32 %v414, %v750
        %v752 = vpop.f32.mrf.mxu0
        %v753 = vadd.f32 %v418, %v752
        %754 = vmatprep.mubr.f32.mxu0 0.0
        %755 = vmatmul.mubr.f32.gmra.mxu0 %v497
        %v756 = vpop.f32.mrf.mxu0
        %v757 = vadd.f32 %v414, %v756
        %v758 = vpop.f32.mrf.mxu0
        %v759 = vadd.f32 %v418, %v758
        %760 = vmatprep.mubr.f32.mxu0 0.0
        %761 = vmatmul.mubr.f32.gmra.mxu0 %v500
        %v762 = vpop.f32.mrf.mxu0
        %v763 = vadd.f32 %v414, %v762
        %v764 = vpop.f32.mrf.mxu0
        %v765 = vadd.f32 %v418, %v764
        %766 = vmatprep.mubr.f32.mxu0 0.0
        %767 = vmatmul.mubr.f32.gmra.mxu0 %v503
        %v768 = vpop.f32.mrf.mxu0
        %v769 = vadd.f32 %v414, %v768
        %v770 = vpop.f32.mrf.mxu0
        %v771 = vadd.f32 %v418, %v770
        %772 = vmatprep.mubr.f32.mxu0 0.0
        %773 = vmatmul.mubr.f32.gmra.mxu0 %v506
        %v774 = vpop.f32.mrf.mxu0
        %v775 = vadd.f32 %v414, %v774
        %v776 = vpop.f32.mrf.mxu0
        %v777 = vadd.f32 %v418, %v776
        %778 = vmatprep.mubr.f32.mxu0 0.0
        %779 = vmatmul.mubr.f32.gmra.mxu0 %v509
        %v780 = vpop.f32.mrf.mxu0
        %v781 = vadd.f32 %v414, %v780
        %v782 = vpop.f32.mrf.mxu0
        %v783 = vadd.f32 %v418, %v782
        %784 = vmatprep.mubr.f32.mxu0 0.0
        %785 = vmatmul.mubr.f32.gmra.mxu0 %v512
        %v786 = vpop.f32.mrf.mxu0
        %v787 = vadd.f32 %v414, %v786
        %v788 = vpop.f32.mrf.mxu0
        %v789 = vadd.f32 %v418, %v788
        %790 = vmatprep.mubr.f32.mxu0 0.0
        %791 = vmatmul.mubr.f32.gmra.mxu0 %v515
        %v792 = vpop.f32.mrf.mxu0
        %v793 = vadd.f32 %v414, %v792
        %v794 = vpop.f32.mrf.mxu0
        %v795 = vadd.f32 %v418, %v794
        %796 = vmatprep.mubr.f32.mxu0 0.0
        %797 = vmatmul.mubr.f32.gmra.mxu0 %v518
        %v798 = vpop.f32.mrf.mxu0
        %v799 = vadd.f32 %v414, %v798
        %v800 = vpop.f32.mrf.mxu0
        %v801 = vadd.f32 %v418, %v800
        %802 = vmatprep.mubr.f32.mxu0 0.0
        %803 = vmatmul.mubr.f32.gmra.mxu0 %v521
        %v804 = vpop.f32.mrf.mxu0
        %v805 = vadd.f32 %v414, %v804
        %v806 = vpop.f32.mrf.mxu0
        %v807 = vadd.f32 %v418, %v806
        %808 = vdwg.mxu0
        %809 = vmatprep.subr.mxu0 0.0
        %810 = vmatpush1.msra.mxu0 0.0
        %811 = vmatprep.subr.mxu0 0.0
        %812 = vmatpush1.msra.mxu0 0.0
        %813 = vmatprep.subr.mxu0 0.0
        %814 = vmatpush1.msra.mxu0 0.0
        %815 = vmatprep.subr.mxu0 0.0
        %816 = vmatpush1.msra.mxu0 0.0
        %817 = vmatprep.subr.mxu0 0.0
        %818 = vmatpush1.msra.mxu0 0.0
        %819 = vmatprep.subr.mxu0 0.0
        %820 = vmatpush1.msra.mxu0 0.0
        %821 = vmatprep.subr.mxu0 0.0
        %822 = vmatpush1.msra.mxu0 0.0
        %823 = vmatprep.subr.mxu0 0.0
        %824 = vmatpush1.msra.mxu0 0.0
        %825 = vmatprep.subr.mxu0 %v388
        %826 = vmatpush1.msra.mxu0 %v387
        %827 = vmatprep.subr.mxu0 %v372
        %828 = vmatpush1.msra.mxu0 %v371
        %829 = vmatprep.subr.mxu0 %v356
        %830 = vmatpush1.msra.mxu0 %v355
        %831 = vmatprep.subr.mxu0 %v340
        %832 = vmatpush1.msra.mxu0 %v339
        %833 = vmatprep.subr.mxu0 %v324
        %834 = vmatpush1.msra.mxu0 %v323
        %835 = vmatprep.subr.mxu0 %v308
        %836 = vmatpush1.msra.mxu0 %v307
        %837 = vmatprep.subr.mxu0 %v292
        %838 = vmatpush1.msra.mxu0 %v291
        %839 = vmatprep.subr.mxu0 %v276
        %840 = vmatpush1.msra.mxu0 %v275
        %841 = vmatprep.subr.mxu0 0.0
        %842 = vmatpush2.msra.mxu0 0.0
        %843 = vmatprep.subr.mxu0 0.0
        %844 = vmatpush2.msra.mxu0 0.0
        %845 = vmatprep.subr.mxu0 0.0
        %846 = vmatpush2.msra.mxu0 0.0
        %847 = vmatprep.subr.mxu0 0.0
        %848 = vmatpush2.msra.mxu0 0.0
        %849 = vmatprep.subr.mxu0 0.0
        %850 = vmatpush2.msra.mxu0 0.0
        %851 = vmatprep.subr.mxu0 0.0
        %852 = vmatpush2.msra.mxu0 0.0
        %853 = vmatprep.subr.mxu0 0.0
        %854 = vmatpush2.msra.mxu0 0.0
        %855 = vmatprep.subr.mxu0 0.0
        %856 = vmatpush2.msra.mxu0 0.0
        %857 = vmatprep.subr.mxu0 0.0
        %858 = vmatpush2.msra.mxu0 0.0
        %859 = vmatprep.subr.mxu0 0.0
        %860 = vmatpush2.msra.mxu0 0.0
        %861 = vmatprep.subr.mxu0 0.0
        %862 = vmatpush2.msra.mxu0 0.0
        %863 = vmatprep.subr.mxu0 0.0
        %864 = vmatpush2.msra.mxu0 0.0
        %865 = vmatprep.subr.mxu0 0.0
        %866 = vmatpush2.msra.mxu0 0.0
        %867 = vmatprep.subr.mxu0 0.0
        %868 = vmatpush2.msra.mxu0 0.0
        %869 = vmatprep.subr.mxu0 0.0
        %870 = vmatpush2.msra.mxu0 0.0
        %871 = vmatprep.subr.mxu0 0.0
        %872 = vmatpush2.msra.mxu0 0.0
        %873 = vmatprep.mubr.f32.mxu0 0.0
        %874 = vmatmul.mubr.f32.gmra.mxu0 %v485
        %v875 = vpop.f32.mrf.mxu0
        %v876 = vadd.f32 %v422, %v875
        %v877 = vpop.f32.mrf.mxu0
        %v878 = vadd.f32 %v426, %v877
        %879 = vmatprep.mubr.f32.mxu0 0.0
        %880 = vmatmul.mubr.f32.gmra.mxu0 %v488
        %v881 = vpop.f32.mrf.mxu0
        %v882 = vadd.f32 %v422, %v881
        %v883 = vpop.f32.mrf.mxu0
        %v884 = vadd.f32 %v426, %v883
        %885 = vmatprep.mubr.f32.mxu0 0.0
        %886 = vmatmul.mubr.f32.gmra.mxu0 %v491
        %v887 = vpop.f32.mrf.mxu0
        %v888 = vadd.f32 %v422, %v887
        %v889 = vpop.f32.mrf.mxu0
        %v890 = vadd.f32 %v426, %v889
        %891 = vmatprep.mubr.f32.mxu0 0.0
        %892 = vmatmul.mubr.f32.gmra.mxu0 %v494
        %v893 = vpop.f32.mrf.mxu0
        %v894 = vadd.f32 %v422, %v893
        %v895 = vpop.f32.mrf.mxu0
        %v896 = vadd.f32 %v426, %v895
        %897 = vmatprep.mubr.f32.mxu0 0.0
        %898 = vmatmul.mubr.f32.gmra.mxu0 %v497
        %v899 = vpop.f32.mrf.mxu0
        %v900 = vadd.f32 %v422, %v899
        %v901 = vpop.f32.mrf.mxu0
        %v902 = vadd.f32 %v426, %v901
        %903 = vmatprep.mubr.f32.mxu0 0.0
        %904 = vmatmul.mubr.f32.gmra.mxu0 %v500
        %v905 = vpop.f32.mrf.mxu0
        %v906 = vadd.f32 %v422, %v905
        %v907 = vpop.f32.mrf.mxu0
        %v908 = vadd.f32 %v426, %v907
        %909 = vmatprep.mubr.f32.mxu0 0.0
        %910 = vmatmul.mubr.f32.gmra.mxu0 %v503
        %v911 = vpop.f32.mrf.mxu0
        %v912 = vadd.f32 %v422, %v911
        %v913 = vpop.f32.mrf.mxu0
        %v914 = vadd.f32 %v426, %v913
        %915 = vmatprep.mubr.f32.mxu0 0.0
        %916 = vmatmul.mubr.f32.gmra.mxu0 %v506
        %v917 = vpop.f32.mrf.mxu0
        %v918 = vadd.f32 %v422, %v917
        %v919 = vpop.f32.mrf.mxu0
        %v920 = vadd.f32 %v426, %v919
        %921 = vmatprep.mubr.f32.mxu0 0.0
        %922 = vmatmul.mubr.f32.gmra.mxu0 %v509
        %v923 = vpop.f32.mrf.mxu0
        %v924 = vadd.f32 %v422, %v923
        %v925 = vpop.f32.mrf.mxu0
        %v926 = vadd.f32 %v426, %v925
        %927 = vmatprep.mubr.f32.mxu0 0.0
        %928 = vmatmul.mubr.f32.gmra.mxu0 %v512
        %v929 = vpop.f32.mrf.mxu0
        %v930 = vadd.f32 %v422, %v929
        %v931 = vpop.f32.mrf.mxu0
        %v932 = vadd.f32 %v426, %v931
        %933 = vmatprep.mubr.f32.mxu0 0.0
        %934 = vmatmul.mubr.f32.gmra.mxu0 %v515
        %v935 = vpop.f32.mrf.mxu0
        %v936 = vadd.f32 %v422, %v935
        %v937 = vpop.f32.mrf.mxu0
        %v938 = vadd.f32 %v426, %v937
        %939 = vmatprep.mubr.f32.mxu0 0.0
        %940 = vmatmul.mubr.f32.gmra.mxu0 %v518
        %v941 = vpop.f32.mrf.mxu0
        %v942 = vadd.f32 %v422, %v941
        %v943 = vpop.f32.mrf.mxu0
        %v944 = vadd.f32 %v426, %v943
        %945 = vmatprep.mubr.f32.mxu0 0.0
        %946 = vmatmul.mubr.f32.gmra.mxu0 %v521
        %v947 = vpop.f32.mrf.mxu0
        %v948 = vadd.f32 %v422, %v947
        %v949 = vpop.f32.mrf.mxu0
        %v950 = vadd.f32 %v426, %v949
        %951 = vdwg.mxu0
        %952 = vmatprep.subr.mxu0 0.0
        %953 = vmatpush1.msra.mxu0 0.0
        %954 = vmatprep.subr.mxu0 0.0
        %955 = vmatpush1.msra.mxu0 0.0
        %956 = vmatprep.subr.mxu0 0.0
        %957 = vmatpush1.msra.mxu0 0.0
        %958 = vmatprep.subr.mxu0 0.0
        %959 = vmatpush1.msra.mxu0 0.0
        %960 = vmatprep.subr.mxu0 0.0
        %961 = vmatpush1.msra.mxu0 0.0
        %962 = vmatprep.subr.mxu0 0.0
        %963 = vmatpush1.msra.mxu0 0.0
        %964 = vmatprep.subr.mxu0 0.0
        %965 = vmatpush1.msra.mxu0 0.0
        %966 = vmatprep.subr.mxu0 0.0
        %967 = vmatpush1.msra.mxu0 0.0
        %968 = vmatprep.subr.mxu0 %v390
        %969 = vmatpush1.msra.mxu0 %v389
        %970 = vmatprep.subr.mxu0 %v374
        %971 = vmatpush1.msra.mxu0 %v373
        %972 = vmatprep.subr.mxu0 %v358
        %973 = vmatpush1.msra.mxu0 %v357
        %974 = vmatprep.subr.mxu0 %v342
        %975 = vmatpush1.msra.mxu0 %v341
        %976 = vmatprep.subr.mxu0 %v326
        %977 = vmatpush1.msra.mxu0 %v325
        %978 = vmatprep.subr.mxu0 %v310
        %979 = vmatpush1.msra.mxu0 %v309
        %980 = vmatprep.subr.mxu0 %v294
        %981 = vmatpush1.msra.mxu0 %v293
        %982 = vmatprep.subr.mxu0 %v278
        %983 = vmatpush1.msra.mxu0 %v277
        %984 = vmatprep.subr.mxu0 0.0
        %985 = vmatpush2.msra.mxu0 0.0
        %986 = vmatprep.subr.mxu0 0.0
        %987 = vmatpush2.msra.mxu0 0.0
        %988 = vmatprep.subr.mxu0 0.0
        %989 = vmatpush2.msra.mxu0 0.0
        %990 = vmatprep.subr.mxu0 0.0
        %991 = vmatpush2.msra.mxu0 0.0
        %992 = vmatprep.subr.mxu0 0.0
        %993 = vmatpush2.msra.mxu0 0.0
        %994 = vmatprep.subr.mxu0 0.0
        %995 = vmatpush2.msra.mxu0 0.0
        %996 = vmatprep.subr.mxu0 0.0
        %997 = vmatpush2.msra.mxu0 0.0
        %998 = vmatprep.subr.mxu0 0.0
        %999 = vmatpush2.msra.mxu0 0.0
        %1000 = vmatprep.subr.mxu0 0.0
        %1001 = vmatpush2.msra.mxu0 0.0
        %1002 = vmatprep.subr.mxu0 0.0
        %1003 = vmatpush2.msra.mxu0 0.0
        %1004 = vmatprep.subr.mxu0 0.0
        %1005 = vmatpush2.msra.mxu0 0.0
        %1006 = vmatprep.subr.mxu0 0.0
        %1007 = vmatpush2.msra.mxu0 0.0
        %1008 = vmatprep.subr.mxu0 0.0
        %1009 = vmatpush2.msra.mxu0 0.0
        %1010 = vmatprep.subr.mxu0 0.0
        %1011 = vmatpush2.msra.mxu0 0.0
        %1012 = vmatprep.subr.mxu0 0.0
        %1013 = vmatpush2.msra.mxu0 0.0
        %1014 = vmatprep.subr.mxu0 0.0
        %1015 = vmatpush2.msra.mxu0 0.0
        %1016 = vmatprep.mubr.f32.mxu0 0.0
        %1017 = vmatmul.mubr.f32.gmra.mxu0 %v485
        %v1018 = vpop.f32.mrf.mxu0
        %v1019 = vadd.f32 %v430, %v1018
        %v1020 = vpop.f32.mrf.mxu0
        %v1021 = vadd.f32 %v434, %v1020
        %1022 = vmatprep.mubr.f32.mxu0 0.0
        %1023 = vmatmul.mubr.f32.gmra.mxu0 %v488
        %v1024 = vpop.f32.mrf.mxu0
        %v1025 = vadd.f32 %v430, %v1024
        %v1026 = vpop.f32.mrf.mxu0
        %v1027 = vadd.f32 %v434, %v1026
        %1028 = vmatprep.mubr.f32.mxu0 0.0
        %1029 = vmatmul.mubr.f32.gmra.mxu0 %v491
        %v1030 = vpop.f32.mrf.mxu0
        %v1031 = vadd.f32 %v430, %v1030
        %v1032 = vpop.f32.mrf.mxu0
        %v1033 = vadd.f32 %v434, %v1032
        %1034 = vmatprep.mubr.f32.mxu0 0.0
        %1035 = vmatmul.mubr.f32.gmra.mxu0 %v494
        %v1036 = vpop.f32.mrf.mxu0
        %v1037 = vadd.f32 %v430, %v1036
        %v1038 = vpop.f32.mrf.mxu0
        %v1039 = vadd.f32 %v434, %v1038
        %1040 = vmatprep.mubr.f32.mxu0 0.0
        %1041 = vmatmul.mubr.f32.gmra.mxu0 %v497
        %v1042 = vpop.f32.mrf.mxu0
        %v1043 = vadd.f32 %v430, %v1042
        %v1044 = vpop.f32.mrf.mxu0
        %v1045 = vadd.f32 %v434, %v1044
        %1046 = vmatprep.mubr.f32.mxu0 0.0
        %1047 = vmatmul.mubr.f32.gmra.mxu0 %v500
        %v1048 = vpop.f32.mrf.mxu0
        %v1049 = vadd.f32 %v430, %v1048
        %v1050 = vpop.f32.mrf.mxu0
        %v1051 = vadd.f32 %v434, %v1050
        %1052 = vmatprep.mubr.f32.mxu0 0.0
        %1053 = vmatmul.mubr.f32.gmra.mxu0 %v503
        %v1054 = vpop.f32.mrf.mxu0
        %v1055 = vadd.f32 %v430, %v1054
        %v1056 = vpop.f32.mrf.mxu0
        %v1057 = vadd.f32 %v434, %v1056
        %1058 = vmatprep.mubr.f32.mxu0 0.0
        %1059 = vmatmul.mubr.f32.gmra.mxu0 %v506
        %v1060 = vpop.f32.mrf.mxu0
        %v1061 = vadd.f32 %v430, %v1060
        %v1062 = vpop.f32.mrf.mxu0
        %v1063 = vadd.f32 %v434, %v1062
        %1064 = vmatprep.mubr.f32.mxu0 0.0
        %1065 = vmatmul.mubr.f32.gmra.mxu0 %v509
        %v1066 = vpop.f32.mrf.mxu0
        %v1067 = vadd.f32 %v430, %v1066
        %v1068 = vpop.f32.mrf.mxu0
        %v1069 = vadd.f32 %v434, %v1068
        %1070 = vmatprep.mubr.f32.mxu0 0.0
        %1071 = vmatmul.mubr.f32.gmra.mxu0 %v512
        %v1072 = vpop.f32.mrf.mxu0
        %v1073 = vadd.f32 %v430, %v1072
        %v1074 = vpop.f32.mrf.mxu0
        %v1075 = vadd.f32 %v434, %v1074
        %1076 = vmatprep.mubr.f32.mxu0 0.0
        %1077 = vmatmul.mubr.f32.gmra.mxu0 %v515
        %v1078 = vpop.f32.mrf.mxu0
        %v1079 = vadd.f32 %v430, %v1078
        %v1080 = vpop.f32.mrf.mxu0
        %v1081 = vadd.f32 %v434, %v1080
        %1082 = vmatprep.mubr.f32.mxu0 0.0
        %1083 = vmatmul.mubr.f32.gmra.mxu0 %v518
        %v1084 = vpop.f32.mrf.mxu0
        %v1085 = vadd.f32 %v430, %v1084
        %v1086 = vpop.f32.mrf.mxu0
        %v1087 = vadd.f32 %v434, %v1086
        %1088 = vmatprep.mubr.f32.mxu0 0.0
        %1089 = vmatmul.mubr.f32.gmra.mxu0 %v521
        %v1090 = vpop.f32.mrf.mxu0
        %v1091 = vadd.f32 %v430, %v1090
        %v1092 = vpop.f32.mrf.mxu0
        %v1093 = vadd.f32 %v434, %v1092
        %1094 = vdwg.mxu0
        %1095 = vmatprep.subr.mxu0 0.0
        %1096 = vmatpush1.msra.mxu0 0.0
        %1097 = vmatprep.subr.mxu0 0.0
        %1098 = vmatpush1.msra.mxu0 0.0
        %1099 = vmatprep.subr.mxu0 0.0
        %1100 = vmatpush1.msra.mxu0 0.0
        %1101 = vmatprep.subr.mxu0 0.0
        %1102 = vmatpush1.msra.mxu0 0.0
        %1103 = vmatprep.subr.mxu0 0.0
        %1104 = vmatpush1.msra.mxu0 0.0
        %1105 = vmatprep.subr.mxu0 0.0
        %1106 = vmatpush1.msra.mxu0 0.0
        %1107 = vmatprep.subr.mxu0 0.0
        %1108 = vmatpush1.msra.mxu0 0.0
        %1109 = vmatprep.subr.mxu0 0.0
        %1110 = vmatpush1.msra.mxu0 0.0
        %1111 = vmatprep.subr.mxu0 %v392
        %1112 = vmatpush1.msra.mxu0 %v391
        %1113 = vmatprep.subr.mxu0 %v376
        %1114 = vmatpush1.msra.mxu0 %v375
        %1115 = vmatprep.subr.mxu0 %v360
        %1116 = vmatpush1.msra.mxu0 %v359
        %1117 = vmatprep.subr.mxu0 %v344
        %1118 = vmatpush1.msra.mxu0 %v343
        %1119 = vmatprep.subr.mxu0 %v328
        %1120 = vmatpush1.msra.mxu0 %v327
        %1121 = vmatprep.subr.mxu0 %v312
        %1122 = vmatpush1.msra.mxu0 %v311
        %1123 = vmatprep.subr.mxu0 %v296
        %1124 = vmatpush1.msra.mxu0 %v295
        %1125 = vmatprep.subr.mxu0 %v280
        %1126 = vmatpush1.msra.mxu0 %v279
        %1127 = vmatprep.subr.mxu0 0.0
        %1128 = vmatpush2.msra.mxu0 0.0
        %1129 = vmatprep.subr.mxu0 0.0
        %1130 = vmatpush2.msra.mxu0 0.0
        %1131 = vmatprep.subr.mxu0 0.0
        %1132 = vmatpush2.msra.mxu0 0.0
        %1133 = vmatprep.subr.mxu0 0.0
        %1134 = vmatpush2.msra.mxu0 0.0
        %1135 = vmatprep.subr.mxu0 0.0
        %1136 = vmatpush2.msra.mxu0 0.0
        %1137 = vmatprep.subr.mxu0 0.0
        %1138 = vmatpush2.msra.mxu0 0.0
        %1139 = vmatprep.subr.mxu0 0.0
        %1140 = vmatpush2.msra.mxu0 0.0
        %1141 = vmatprep.subr.mxu0 0.0
        %1142 = vmatpush2.msra.mxu0 0.0
        %1143 = vmatprep.subr.mxu0 0.0
        %1144 = vmatpush2.msra.mxu0 0.0
        %1145 = vmatprep.subr.mxu0 0.0
        %1146 = vmatpush2.msra.mxu0 0.0
        %1147 = vmatprep.subr.mxu0 0.0
        %1148 = vmatpush2.msra.mxu0 0.0
        %1149 = vmatprep.subr.mxu0 0.0
        %1150 = vmatpush2.msra.mxu0 0.0
        %1151 = vmatprep.subr.mxu0 0.0
        %1152 = vmatpush2.msra.mxu0 0.0
        %1153 = vmatprep.subr.mxu0 0.0
        %1154 = vmatpush2.msra.mxu0 0.0
        %1155 = vmatprep.subr.mxu0 0.0
        %1156 = vmatpush2.msra.mxu0 0.0
        %1157 = vmatprep.subr.mxu0 0.0
        %1158 = vmatpush2.msra.mxu0 0.0
        %1159 = vmatprep.mubr.f32.mxu0 0.0
        %1160 = vmatmul.mubr.f32.gmra.mxu0 %v485
        %v1161 = vpop.f32.mrf.mxu0
        %v1162 = vadd.f32 %v438, %v1161
        %v1163 = vpop.f32.mrf.mxu0
        %v1164 = vadd.f32 %v442, %v1163
        %1165 = vmatprep.mubr.f32.mxu0 0.0
        %1166 = vmatmul.mubr.f32.gmra.mxu0 %v488
        %v1167 = vpop.f32.mrf.mxu0
        %v1168 = vadd.f32 %v438, %v1167
        %v1169 = vpop.f32.mrf.mxu0
        %v1170 = vadd.f32 %v442, %v1169
        %1171 = vmatprep.mubr.f32.mxu0 0.0
        %1172 = vmatmul.mubr.f32.gmra.mxu0 %v491
        %v1173 = vpop.f32.mrf.mxu0
        %v1174 = vadd.f32 %v438, %v1173
        %v1175 = vpop.f32.mrf.mxu0
        %v1176 = vadd.f32 %v442, %v1175
        %1177 = vmatprep.mubr.f32.mxu0 0.0
        %1178 = vmatmul.mubr.f32.gmra.mxu0 %v494
        %v1179 = vpop.f32.mrf.mxu0
        %v1180 = vadd.f32 %v438, %v1179
        %v1181 = vpop.f32.mrf.mxu0
        %v1182 = vadd.f32 %v442, %v1181
        %1183 = vmatprep.mubr.f32.mxu0 0.0
        %1184 = vmatmul.mubr.f32.gmra.mxu0 %v497
        %v1185 = vpop.f32.mrf.mxu0
        %v1186 = vadd.f32 %v438, %v1185
        %v1187 = vpop.f32.mrf.mxu0
        %v1188 = vadd.f32 %v442, %v1187
        %1189 = vmatprep.mubr.f32.mxu0 0.0
        %1190 = vmatmul.mubr.f32.gmra.mxu0 %v500
        %v1191 = vpop.f32.mrf.mxu0
        %v1192 = vadd.f32 %v438, %v1191
        %v1193 = vpop.f32.mrf.mxu0
        %v1194 = vadd.f32 %v442, %v1193
        %1195 = vmatprep.mubr.f32.mxu0 0.0
        %1196 = vmatmul.mubr.f32.gmra.mxu0 %v503
        %v1197 = vpop.f32.mrf.mxu0
        %v1198 = vadd.f32 %v438, %v1197
        %v1199 = vpop.f32.mrf.mxu0
        %v1200 = vadd.f32 %v442, %v1199
        %1201 = vmatprep.mubr.f32.mxu0 0.0
        %1202 = vmatmul.mubr.f32.gmra.mxu0 %v506
        %v1203 = vpop.f32.mrf.mxu0
        %v1204 = vadd.f32 %v438, %v1203
        %v1205 = vpop.f32.mrf.mxu0
        %v1206 = vadd.f32 %v442, %v1205
        %1207 = vmatprep.mubr.f32.mxu0 0.0
        %1208 = vmatmul.mubr.f32.gmra.mxu0 %v509
        %v1209 = vpop.f32.mrf.mxu0
        %v1210 = vadd.f32 %v438, %v1209
        %v1211 = vpop.f32.mrf.mxu0
        %v1212 = vadd.f32 %v442, %v1211
        %1213 = vmatprep.mubr.f32.mxu0 0.0
        %1214 = vmatmul.mubr.f32.gmra.mxu0 %v512
        %v1215 = vpop.f32.mrf.mxu0
        %v1216 = vadd.f32 %v438, %v1215
        %v1217 = vpop.f32.mrf.mxu0
        %v1218 = vadd.f32 %v442, %v1217
        %1219 = vmatprep.mubr.f32.mxu0 0.0
        %1220 = vmatmul.mubr.f32.gmra.mxu0 %v515
        %v1221 = vpop.f32.mrf.mxu0
        %v1222 = vadd.f32 %v438, %v1221
        %v1223 = vpop.f32.mrf.mxu0
        %v1224 = vadd.f32 %v442, %v1223
        %1225 = vmatprep.mubr.f32.mxu0 0.0
        %1226 = vmatmul.mubr.f32.gmra.mxu0 %v518
        %v1227 = vpop.f32.mrf.mxu0
        %v1228 = vadd.f32 %v438, %v1227
        %v1229 = vpop.f32.mrf.mxu0
        %v1230 = vadd.f32 %v442, %v1229
        %1231 = vmatprep.mubr.f32.mxu0 0.0
        %1232 = vmatmul.mubr.f32.gmra.mxu0 %v521
        %v1233 = vpop.f32.mrf.mxu0
        %v1234 = vadd.f32 %v438, %v1233
        %v1235 = vpop.f32.mrf.mxu0
        %v1236 = vadd.f32 %v442, %v1235
        %1237 = vdwg.mxu0
        %1238 = vmatprep.subr.mxu0 0.0
        %1239 = vmatpush1.msra.mxu0 0.0
        %1240 = vmatprep.subr.mxu0 0.0
        %1241 = vmatpush1.msra.mxu0 0.0
        %1242 = vmatprep.subr.mxu0 0.0
        %1243 = vmatpush1.msra.mxu0 0.0
        %1244 = vmatprep.subr.mxu0 0.0
        %1245 = vmatpush1.msra.mxu0 0.0
        %1246 = vmatprep.subr.mxu0 0.0
        %1247 = vmatpush1.msra.mxu0 0.0
        %1248 = vmatprep.subr.mxu0 0.0
        %1249 = vmatpush1.msra.mxu0 0.0
        %1250 = vmatprep.subr.mxu0 0.0
        %1251 = vmatpush1.msra.mxu0 0.0
        %1252 = vmatprep.subr.mxu0 0.0
        %1253 = vmatpush1.msra.mxu0 0.0
        %1254 = vmatprep.subr.mxu0 %v394
        %1255 = vmatpush1.msra.mxu0 %v393
        %1256 = vmatprep.subr.mxu0 %v378
        %1257 = vmatpush1.msra.mxu0 %v377
        %1258 = vmatprep.subr.mxu0 %v362
        %1259 = vmatpush1.msra.mxu0 %v361
        %1260 = vmatprep.subr.mxu0 %v346
        %1261 = vmatpush1.msra.mxu0 %v345
        %1262 = vmatprep.subr.mxu0 %v330
        %1263 = vmatpush1.msra.mxu0 %v329
        %1264 = vmatprep.subr.mxu0 %v314
        %1265 = vmatpush1.msra.mxu0 %v313
        %1266 = vmatprep.subr.mxu0 %v298
        %1267 = vmatpush1.msra.mxu0 %v297
        %1268 = vmatprep.subr.mxu0 %v282
        %1269 = vmatpush1.msra.mxu0 %v281
        %1270 = vmatprep.subr.mxu0 0.0
        %1271 = vmatpush2.msra.mxu0 0.0
        %1272 = vmatprep.subr.mxu0 0.0
        %1273 = vmatpush2.msra.mxu0 0.0
        %1274 = vmatprep.subr.mxu0 0.0
        %1275 = vmatpush2.msra.mxu0 0.0
        %1276 = vmatprep.subr.mxu0 0.0
        %1277 = vmatpush2.msra.mxu0 0.0
        %1278 = vmatprep.subr.mxu0 0.0
        %1279 = vmatpush2.msra.mxu0 0.0
        %1280 = vmatprep.subr.mxu0 0.0
        %1281 = vmatpush2.msra.mxu0 0.0
        %1282 = vmatprep.subr.mxu0 0.0
        %1283 = vmatpush2.msra.mxu0 0.0
        %1284 = vmatprep.subr.mxu0 0.0
        %1285 = vmatpush2.msra.mxu0 0.0
        %1286 = vmatprep.subr.mxu0 0.0
        %1287 = vmatpush2.msra.mxu0 0.0
        %1288 = vmatprep.subr.mxu0 0.0
        %1289 = vmatpush2.msra.mxu0 0.0
        %1290 = vmatprep.subr.mxu0 0.0
        %1291 = vmatpush2.msra.mxu0 0.0
        %1292 = vmatprep.subr.mxu0 0.0
        %1293 = vmatpush2.msra.mxu0 0.0
        %1294 = vmatprep.subr.mxu0 0.0
        %1295 = vmatpush2.msra.mxu0 0.0
        %1296 = vmatprep.subr.mxu0 0.0
        %1297 = vmatpush2.msra.mxu0 0.0
        %1298 = vmatprep.subr.mxu0 0.0
        %1299 = vmatpush2.msra.mxu0 0.0
        %1300 = vmatprep.subr.mxu0 0.0
        %1301 = vmatpush2.msra.mxu0 0.0
        %1302 = vmatprep.mubr.f32.mxu0 0.0
        %1303 = vmatmul.mubr.f32.gmra.mxu0 %v485
        %v1304 = vpop.f32.mrf.mxu0
        %v1305 = vadd.f32 %v446, %v1304
        %v1306 = vpop.f32.mrf.mxu0
        %v1307 = vadd.f32 %v450, %v1306
        %1308 = vmatprep.mubr.f32.mxu0 0.0
        %1309 = vmatmul.mubr.f32.gmra.mxu0 %v488
        %v1310 = vpop.f32.mrf.mxu0
        %v1311 = vadd.f32 %v446, %v1310
        %v1312 = vpop.f32.mrf.mxu0
        %v1313 = vadd.f32 %v450, %v1312
        %1314 = vmatprep.mubr.f32.mxu0 0.0
        %1315 = vmatmul.mubr.f32.gmra.mxu0 %v491
        %v1316 = vpop.f32.mrf.mxu0
        %v1317 = vadd.f32 %v446, %v1316
        %v1318 = vpop.f32.mrf.mxu0
        %v1319 = vadd.f32 %v450, %v1318
        %1320 = vmatprep.mubr.f32.mxu0 0.0
        %1321 = vmatmul.mubr.f32.gmra.mxu0 %v494
        %v1322 = vpop.f32.mrf.mxu0
        %v1323 = vadd.f32 %v446, %v1322
        %v1324 = vpop.f32.mrf.mxu0
        %v1325 = vadd.f32 %v450, %v1324
        %1326 = vmatprep.mubr.f32.mxu0 0.0
        %1327 = vmatmul.mubr.f32.gmra.mxu0 %v497
        %v1328 = vpop.f32.mrf.mxu0
        %v1329 = vadd.f32 %v446, %v1328
        %v1330 = vpop.f32.mrf.mxu0
        %v1331 = vadd.f32 %v450, %v1330
        %1332 = vmatprep.mubr.f32.mxu0 0.0
        %1333 = vmatmul.mubr.f32.gmra.mxu0 %v500
        %v1334 = vpop.f32.mrf.mxu0
        %v1335 = vadd.f32 %v446, %v1334
        %v1336 = vpop.f32.mrf.mxu0
        %v1337 = vadd.f32 %v450, %v1336
        %1338 = vmatprep.mubr.f32.mxu0 0.0
        %1339 = vmatmul.mubr.f32.gmra.mxu0 %v503
        %v1340 = vpop.f32.mrf.mxu0
        %v1341 = vadd.f32 %v446, %v1340
        %v1342 = vpop.f32.mrf.mxu0
        %v1343 = vadd.f32 %v450, %v1342
        %1344 = vmatprep.mubr.f32.mxu0 0.0
        %1345 = vmatmul.mubr.f32.gmra.mxu0 %v506
        %v1346 = vpop.f32.mrf.mxu0
        %v1347 = vadd.f32 %v446, %v1346
        %v1348 = vpop.f32.mrf.mxu0
        %v1349 = vadd.f32 %v450, %v1348
        %1350 = vmatprep.mubr.f32.mxu0 0.0
        %1351 = vmatmul.mubr.f32.gmra.mxu0 %v509
        %v1352 = vpop.f32.mrf.mxu0
        %v1353 = vadd.f32 %v446, %v1352
        %v1354 = vpop.f32.mrf.mxu0
        %v1355 = vadd.f32 %v450, %v1354
        %1356 = vmatprep.mubr.f32.mxu0 0.0
        %1357 = vmatmul.mubr.f32.gmra.mxu0 %v512
        %v1358 = vpop.f32.mrf.mxu0
        %v1359 = vadd.f32 %v446, %v1358
        %v1360 = vpop.f32.mrf.mxu0
        %v1361 = vadd.f32 %v450, %v1360
        %1362 = vmatprep.mubr.f32.mxu0 0.0
        %1363 = vmatmul.mubr.f32.gmra.mxu0 %v515
        %v1364 = vpop.f32.mrf.mxu0
        %v1365 = vadd.f32 %v446, %v1364
        %v1366 = vpop.f32.mrf.mxu0
        %v1367 = vadd.f32 %v450, %v1366
        %1368 = vmatprep.mubr.f32.mxu0 0.0
        %1369 = vmatmul.mubr.f32.gmra.mxu0 %v518
        %v1370 = vpop.f32.mrf.mxu0
        %v1371 = vadd.f32 %v446, %v1370
        %v1372 = vpop.f32.mrf.mxu0
        %v1373 = vadd.f32 %v450, %v1372
        %1374 = vmatprep.mubr.f32.mxu0 0.0
        %1375 = vmatmul.mubr.f32.gmra.mxu0 %v521
        %v1376 = vpop.f32.mrf.mxu0
        %v1377 = vadd.f32 %v446, %v1376
        %v1378 = vpop.f32.mrf.mxu0
        %v1379 = vadd.f32 %v450, %v1378
        %1380 = vdwg.mxu0
        %1381 = vmatprep.subr.mxu0 0.0
        %1382 = vmatpush1.msra.mxu0 0.0
        %1383 = vmatprep.subr.mxu0 0.0
        %1384 = vmatpush1.msra.mxu0 0.0
        %1385 = vmatprep.subr.mxu0 0.0
        %1386 = vmatpush1.msra.mxu0 0.0
        %1387 = vmatprep.subr.mxu0 0.0
        %1388 = vmatpush1.msra.mxu0 0.0
        %1389 = vmatprep.subr.mxu0 0.0
        %1390 = vmatpush1.msra.mxu0 0.0
        %1391 = vmatprep.subr.mxu0 0.0
        %1392 = vmatpush1.msra.mxu0 0.0
        %1393 = vmatprep.subr.mxu0 0.0
        %1394 = vmatpush1.msra.mxu0 0.0
        %1395 = vmatprep.subr.mxu0 0.0
        %1396 = vmatpush1.msra.mxu0 0.0
        %1397 = vmatprep.subr.mxu0 %v396
        %1398 = vmatpush1.msra.mxu0 %v395
        %1399 = vmatprep.subr.mxu0 %v380
        %1400 = vmatpush1.msra.mxu0 %v379
        %1401 = vmatprep.subr.mxu0 %v364
        %1402 = vmatpush1.msra.mxu0 %v363
        %1403 = vmatprep.subr.mxu0 %v348
        %1404 = vmatpush1.msra.mxu0 %v347
        %1405 = vmatprep.subr.mxu0 %v332
        %1406 = vmatpush1.msra.mxu0 %v331
        %1407 = vmatprep.subr.mxu0 %v316
        %1408 = vmatpush1.msra.mxu0 %v315
        %1409 = vmatprep.subr.mxu0 %v300
        %1410 = vmatpush1.msra.mxu0 %v299
        %1411 = vmatprep.subr.mxu0 %v284
        %1412 = vmatpush1.msra.mxu0 %v283
        %1413 = vmatprep.subr.mxu0 0.0
        %1414 = vmatpush2.msra.mxu0 0.0
        %1415 = vmatprep.subr.mxu0 0.0
        %1416 = vmatpush2.msra.mxu0 0.0
        %1417 = vmatprep.subr.mxu0 0.0
        %1418 = vmatpush2.msra.mxu0 0.0
        %1419 = vmatprep.subr.mxu0 0.0
        %1420 = vmatpush2.msra.mxu0 0.0
        %1421 = vmatprep.subr.mxu0 0.0
        %1422 = vmatpush2.msra.mxu0 0.0
        %1423 = vmatprep.subr.mxu0 0.0
        %1424 = vmatpush2.msra.mxu0 0.0
        %1425 = vmatprep.subr.mxu0 0.0
        %1426 = vmatpush2.msra.mxu0 0.0
        %1427 = vmatprep.subr.mxu0 0.0
        %1428 = vmatpush2.msra.mxu0 0.0
        %1429 = vmatprep.subr.mxu0 0.0
        %1430 = vmatpush2.msra.mxu0 0.0
        %1431 = vmatprep.subr.mxu0 0.0
        %1432 = vmatpush2.msra.mxu0 0.0
        %1433 = vmatprep.subr.mxu0 0.0
        %1434 = vmatpush2.msra.mxu0 0.0
        %1435 = vmatprep.subr.mxu0 0.0
        %1436 = vmatpush2.msra.mxu0 0.0
        %1437 = vmatprep.subr.mxu0 0.0
        %1438 = vmatpush2.msra.mxu0 0.0
        %1439 = vmatprep.subr.mxu0 0.0
        %1440 = vmatpush2.msra.mxu0 0.0
        %1441 = vmatprep.subr.mxu0 0.0
        %1442 = vmatpush2.msra.mxu0 0.0
        %1443 = vmatprep.subr.mxu0 0.0
        %1444 = vmatpush2.msra.mxu0 0.0
        %1445 = vmatprep.mubr.f32.mxu0 0.0
        %1446 = vmatmul.mubr.f32.gmra.mxu0 %v485
        %v1447 = vpop.f32.mrf.mxu0
        %v1448 = vadd.f32 %v454, %v1447
        %v1449 = vpop.f32.mrf.mxu0
        %v1450 = vadd.f32 %v458, %v1449
        %1451 = vmatprep.mubr.f32.mxu0 0.0
        %1452 = vmatmul.mubr.f32.gmra.mxu0 %v488
        %v1453 = vpop.f32.mrf.mxu0
        %v1454 = vadd.f32 %v454, %v1453
        %v1455 = vpop.f32.mrf.mxu0
        %v1456 = vadd.f32 %v458, %v1455
        %1457 = vmatprep.mubr.f32.mxu0 0.0
        %1458 = vmatmul.mubr.f32.gmra.mxu0 %v491
        %v1459 = vpop.f32.mrf.mxu0
        %v1460 = vadd.f32 %v454, %v1459
        %v1461 = vpop.f32.mrf.mxu0
        %v1462 = vadd.f32 %v458, %v1461
        %1463 = vmatprep.mubr.f32.mxu0 0.0
        %1464 = vmatmul.mubr.f32.gmra.mxu0 %v494
        %v1465 = vpop.f32.mrf.mxu0
        %v1466 = vadd.f32 %v454, %v1465
        %v1467 = vpop.f32.mrf.mxu0
        %v1468 = vadd.f32 %v458, %v1467
        %1469 = vmatprep.mubr.f32.mxu0 0.0
        %1470 = vmatmul.mubr.f32.gmra.mxu0 %v497
        %v1471 = vpop.f32.mrf.mxu0
        %v1472 = vadd.f32 %v454, %v1471
        %v1473 = vpop.f32.mrf.mxu0
        %v1474 = vadd.f32 %v458, %v1473
        %1475 = vmatprep.mubr.f32.mxu0 0.0
        %1476 = vmatmul.mubr.f32.gmra.mxu0 %v500
        %v1477 = vpop.f32.mrf.mxu0
        %v1478 = vadd.f32 %v454, %v1477
        %v1479 = vpop.f32.mrf.mxu0
        %v1480 = vadd.f32 %v458, %v1479
        %1481 = vmatprep.mubr.f32.mxu0 0.0
        %1482 = vmatmul.mubr.f32.gmra.mxu0 %v503
        %v1483 = vpop.f32.mrf.mxu0
        %v1484 = vadd.f32 %v454, %v1483
        %v1485 = vpop.f32.mrf.mxu0
        %v1486 = vadd.f32 %v458, %v1485
        %1487 = vmatprep.mubr.f32.mxu0 0.0
        %1488 = vmatmul.mubr.f32.gmra.mxu0 %v506
        %v1489 = vpop.f32.mrf.mxu0
        %v1490 = vadd.f32 %v454, %v1489
        %v1491 = vpop.f32.mrf.mxu0
        %v1492 = vadd.f32 %v458, %v1491
        %1493 = vmatprep.mubr.f32.mxu0 0.0
        %1494 = vmatmul.mubr.f32.gmra.mxu0 %v509
        %v1495 = vpop.f32.mrf.mxu0
        %v1496 = vadd.f32 %v454, %v1495
        %v1497 = vpop.f32.mrf.mxu0
        %v1498 = vadd.f32 %v458, %v1497
        %1499 = vmatprep.mubr.f32.mxu0 0.0
        %1500 = vmatmul.mubr.f32.gmra.mxu0 %v512
        %v1501 = vpop.f32.mrf.mxu0
        %v1502 = vadd.f32 %v454, %v1501
        %v1503 = vpop.f32.mrf.mxu0
        %v1504 = vadd.f32 %v458, %v1503
        %1505 = vmatprep.mubr.f32.mxu0 0.0
        %1506 = vmatmul.mubr.f32.gmra.mxu0 %v515
        %v1507 = vpop.f32.mrf.mxu0
        %v1508 = vadd.f32 %v454, %v1507
        %v1509 = vpop.f32.mrf.mxu0
        %v1510 = vadd.f32 %v458, %v1509
        %1511 = vmatprep.mubr.f32.mxu0 0.0
        %1512 = vmatmul.mubr.f32.gmra.mxu0 %v518
        %v1513 = vpop.f32.mrf.mxu0
        %v1514 = vadd.f32 %v454, %v1513
        %v1515 = vpop.f32.mrf.mxu0
        %v1516 = vadd.f32 %v458, %v1515
        %1517 = vmatprep.mubr.f32.mxu0 0.0
        %1518 = vmatmul.mubr.f32.gmra.mxu0 %v521
        %v1519 = vpop.f32.mrf.mxu0
        %v1520 = vadd.f32 %v454, %v1519
        %v1521 = vpop.f32.mrf.mxu0
        %v1522 = vadd.f32 %v458, %v1521
        %1523 = vdwg.mxu0
        %1524 = vmatprep.subr.mxu0 0.0
        %1525 = vmatpush1.msra.mxu0 0.0
        %1526 = vmatprep.subr.mxu0 0.0
        %1527 = vmatpush1.msra.mxu0 0.0
        %1528 = vmatprep.subr.mxu0 0.0
        %1529 = vmatpush1.msra.mxu0 0.0
        %1530 = vmatprep.subr.mxu0 0.0
        %1531 = vmatpush1.msra.mxu0 0.0
        %1532 = vmatprep.subr.mxu0 0.0
        %1533 = vmatpush1.msra.mxu0 0.0
        %1534 = vmatprep.subr.mxu0 0.0
        %1535 = vmatpush1.msra.mxu0 0.0
        %1536 = vmatprep.subr.mxu0 0.0
        %1537 = vmatpush1.msra.mxu0 0.0
        %1538 = vmatprep.subr.mxu0 0.0
        %1539 = vmatpush1.msra.mxu0 0.0
        %1540 = vmatprep.subr.mxu0 %v398
        %1541 = vmatpush1.msra.mxu0 %v397
        %1542 = vmatprep.subr.mxu0 %v382
        %1543 = vmatpush1.msra.mxu0 %v381
        %1544 = vmatprep.subr.mxu0 %v366
        %1545 = vmatpush1.msra.mxu0 %v365
        %1546 = vmatprep.subr.mxu0 %v350
        %1547 = vmatpush1.msra.mxu0 %v349
        %1548 = vmatprep.subr.mxu0 %v334
        %1549 = vmatpush1.msra.mxu0 %v333
        %1550 = vmatprep.subr.mxu0 %v318
        %1551 = vmatpush1.msra.mxu0 %v317
        %1552 = vmatprep.subr.mxu0 %v302
        %1553 = vmatpush1.msra.mxu0 %v301
        %1554 = vmatprep.subr.mxu0 %v286
        %1555 = vmatpush1.msra.mxu0 %v285
        %1556 = vmatprep.subr.mxu0 0.0
        %1557 = vmatpush2.msra.mxu0 0.0
        %1558 = vmatprep.subr.mxu0 0.0
        %1559 = vmatpush2.msra.mxu0 0.0
        %1560 = vmatprep.subr.mxu0 0.0
        %1561 = vmatpush2.msra.mxu0 0.0
        %1562 = vmatprep.subr.mxu0 0.0
        %1563 = vmatpush2.msra.mxu0 0.0
        %1564 = vmatprep.subr.mxu0 0.0
        %1565 = vmatpush2.msra.mxu0 0.0
        %1566 = vmatprep.subr.mxu0 0.0
        %1567 = vmatpush2.msra.mxu0 0.0
        %1568 = vmatprep.subr.mxu0 0.0
        %1569 = vmatpush2.msra.mxu0 0.0
        %1570 = vmatprep.subr.mxu0 0.0
        %1571 = vmatpush2.msra.mxu0 0.0
        %1572 = vmatprep.subr.mxu0 0.0
        %1573 = vmatpush2.msra.mxu0 0.0
        %1574 = vmatprep.subr.mxu0 0.0
        %1575 = vmatpush2.msra.mxu0 0.0
        %1576 = vmatprep.subr.mxu0 0.0
        %1577 = vmatpush2.msra.mxu0 0.0
        %1578 = vmatprep.subr.mxu0 0.0
        %1579 = vmatpush2.msra.mxu0 0.0
        %1580 = vmatprep.subr.mxu0 0.0
        %1581 = vmatpush2.msra.mxu0 0.0
        %1582 = vmatprep.subr.mxu0 0.0
        %1583 = vmatpush2.msra.mxu0 0.0
        %1584 = vmatprep.subr.mxu0 0.0
        %1585 = vmatpush2.msra.mxu0 0.0
        %1586 = vmatprep.subr.mxu0 0.0
        %1587 = vmatpush2.msra.mxu0 0.0
        %1588 = vmatprep.mubr.f32.mxu0 0.0
        %1589 = vmatmul.mubr.f32.gmra.mxu0 %v485
        %v1590 = vpop.f32.mrf.mxu0
        %v1591 = vadd.f32 %v462, %v1590
        %v1592 = vpop.f32.mrf.mxu0
        %v1593 = vadd.f32 %v466, %v1592
        %1594 = vmatprep.mubr.f32.mxu0 0.0
        %1595 = vmatmul.mubr.f32.gmra.mxu0 %v488
        %v1596 = vpop.f32.mrf.mxu0
        %v1597 = vadd.f32 %v462, %v1596
        %v1598 = vpop.f32.mrf.mxu0
        %v1599 = vadd.f32 %v466, %v1598
        %1600 = vmatprep.mubr.f32.mxu0 0.0
        %1601 = vmatmul.mubr.f32.gmra.mxu0 %v491
        %v1602 = vpop.f32.mrf.mxu0
        %v1603 = vadd.f32 %v462, %v1602
        %v1604 = vpop.f32.mrf.mxu0
        %v1605 = vadd.f32 %v466, %v1604
        %1606 = vmatprep.mubr.f32.mxu0 0.0
        %1607 = vmatmul.mubr.f32.gmra.mxu0 %v494
        %v1608 = vpop.f32.mrf.mxu0
        %v1609 = vadd.f32 %v462, %v1608
        %v1610 = vpop.f32.mrf.mxu0
        %v1611 = vadd.f32 %v466, %v1610
        %1612 = vmatprep.mubr.f32.mxu0 0.0
        %1613 = vmatmul.mubr.f32.gmra.mxu0 %v497
        %v1614 = vpop.f32.mrf.mxu0
        %v1615 = vadd.f32 %v462, %v1614
        %v1616 = vpop.f32.mrf.mxu0
        %v1617 = vadd.f32 %v466, %v1616
        %1618 = vmatprep.mubr.f32.mxu0 0.0
        %1619 = vmatmul.mubr.f32.gmra.mxu0 %v500
        %v1620 = vpop.f32.mrf.mxu0
        %v1621 = vadd.f32 %v462, %v1620
        %v1622 = vpop.f32.mrf.mxu0
        %v1623 = vadd.f32 %v466, %v1622
        %1624 = vmatprep.mubr.f32.mxu0 0.0
        %1625 = vmatmul.mubr.f32.gmra.mxu0 %v503
        %v1626 = vpop.f32.mrf.mxu0
        %v1627 = vadd.f32 %v462, %v1626
        %v1628 = vpop.f32.mrf.mxu0
        %v1629 = vadd.f32 %v466, %v1628
        %1630 = vmatprep.mubr.f32.mxu0 0.0
        %1631 = vmatmul.mubr.f32.gmra.mxu0 %v506
        %v1632 = vpop.f32.mrf.mxu0
        %v1633 = vadd.f32 %v462, %v1632
        %v1634 = vpop.f32.mrf.mxu0
        %v1635 = vadd.f32 %v466, %v1634
        %1636 = vmatprep.mubr.f32.mxu0 0.0
        %1637 = vmatmul.mubr.f32.gmra.mxu0 %v509
        %v1638 = vpop.f32.mrf.mxu0
        %v1639 = vadd.f32 %v462, %v1638
        %v1640 = vpop.f32.mrf.mxu0
        %v1641 = vadd.f32 %v466, %v1640
        %1642 = vmatprep.mubr.f32.mxu0 0.0
        %1643 = vmatmul.mubr.f32.gmra.mxu0 %v512
        %v1644 = vpop.f32.mrf.mxu0
        %v1645 = vadd.f32 %v462, %v1644
        %v1646 = vpop.f32.mrf.mxu0
        %v1647 = vadd.f32 %v466, %v1646
        %1648 = vmatprep.mubr.f32.mxu0 0.0
        %1649 = vmatmul.mubr.f32.gmra.mxu0 %v515
        %v1650 = vpop.f32.mrf.mxu0
        %v1651 = vadd.f32 %v462, %v1650
        %v1652 = vpop.f32.mrf.mxu0
        %v1653 = vadd.f32 %v466, %v1652
        %1654 = vmatprep.mubr.f32.mxu0 0.0
        %1655 = vmatmul.mubr.f32.gmra.mxu0 %v518
        %v1656 = vpop.f32.mrf.mxu0
        %v1657 = vadd.f32 %v462, %v1656
        %v1658 = vpop.f32.mrf.mxu0
        %v1659 = vadd.f32 %v466, %v1658
        %1660 = vmatprep.mubr.f32.mxu0 0.0
        %1661 = vmatmul.mubr.f32.gmra.mxu0 %v521
        %v1662 = vpop.f32.mrf.mxu0
        %v1663 = vadd.f32 %v462, %v1662
        %v1664 = vpop.f32.mrf.mxu0
        %v1665 = vadd.f32 %v466, %v1664
        %1666 = vdwg.mxu0
        %v1667 = vld [vmem:[#allocation2] sm:$0xff]
        %v1668 = vld [vmem:[#allocation2 + $0x8] sm:$0xff]
        %v1669 = vld [vmem:[#allocation2 + $0x10] sm:$0xff]
        %v1670 = vld [vmem:[#allocation2 + $0x18] sm:$0xff]
        %v1671 = vld [vmem:[#allocation2 + $0x20] sm:$0xff]
        %v1672 = vld [vmem:[#allocation2 + $0x28] sm:$0xff]
        %v1673 = vld [vmem:[#allocation2 + $0x30] sm:$0xff]
        %v1674 = vld [vmem:[#allocation2 + $0x38] sm:$0xff]
        %v1675 = vld [vmem:[#allocation2 + $0x40] sm:$0xff]
        %v1676 = vld [vmem:[#allocation2 + $0x48] sm:$0xff]
        %v1677 = vld [vmem:[#allocation2 + $0x50] sm:$0xff]
        %v1678 = vld [vmem:[#allocation2 + $0x58] sm:$0xff]
        %v1679 = vld [vmem:[#allocation2 + $0x60] sm:$0xff]
        %v1680 = vmax.f32 %v590, %v592
        %v1681 = vmax.f32 %v1680, %v733
        %v1682 = vmax.f32 %v1681, %v735
        %v1683 = vmax.f32 %v1682, %v876
        %v1684 = vmax.f32 %v1683, %v878
        %v1685 = vmax.f32 %v1684, %v1019
        %v1686 = vmax.f32 %v1685, %v1021
        %v1687 = vmax.f32 %v1686, %v1162
        %v1688 = vmax.f32 %v1687, %v1164
        %v1689 = vmax.f32 %v1688, %v1305
        %v1690 = vmax.f32 %v1689, %v1307
        %v1691 = vmax.f32 %v1690, %v1448
        %v1692 = vmax.f32 %v1691, %v1450
        %v1693 = vmax.f32 %v1692, %v1591
        %v1694 = vmax.f32 %v1693, %v1593
        %1695 = vmax.xlane.f32.xlu0 %v1694
        %v1696 = vpop.xlane.xlu0 %1695
        %v1697 = vmax.f32 %v596, %v598
        %v1698 = vmax.f32 %v1697, %v739
        %v1699 = vmax.f32 %v1698, %v741
        %v1700 = vmax.f32 %v1699, %v882
        %v1701 = vmax.f32 %v1700, %v884
        %v1702 = vmax.f32 %v1701, %v1025
        %v1703 = vmax.f32 %v1702, %v1027
        %v1704 = vmax.f32 %v1703, %v1168
        %v1705 = vmax.f32 %v1704, %v1170
        %v1706 = vmax.f32 %v1705, %v1311
        %v1707 = vmax.f32 %v1706, %v1313
        %v1708 = vmax.f32 %v1707, %v1454
        %v1709 = vmax.f32 %v1708, %v1456
        %v1710 = vmax.f32 %v1709, %v1597
        %v1711 = vmax.f32 %v1710, %v1599
        %1712 = vmax.xlane.f32.xlu0 %v1711
        %v1713 = vpop.xlane.xlu0 %1712
        %v1714 = vmax.f32 %v602, %v604
        %v1715 = vmax.f32 %v1714, %v745
        %v1716 = vmax.f32 %v1715, %v747
        %v1717 = vmax.f32 %v1716, %v888
        %v1718 = vmax.f32 %v1717, %v890
        %v1719 = vmax.f32 %v1718, %v1031
        %v1720 = vmax.f32 %v1719, %v1033
        %v1721 = vmax.f32 %v1720, %v1174
        %v1722 = vmax.f32 %v1721, %v1176
        %v1723 = vmax.f32 %v1722, %v1317
        %v1724 = vmax.f32 %v1723, %v1319
        %v1725 = vmax.f32 %v1724, %v1460
        %v1726 = vmax.f32 %v1725, %v1462
        %v1727 = vmax.f32 %v1726, %v1603
        %v1728 = vmax.f32 %v1727, %v1605
        %1729 = vmax.xlane.f32.xlu0 %v1728
        %v1730 = vpop.xlane.xlu0 %1729
        %v1731 = vmax.f32 %v608, %v610
        %v1732 = vmax.f32 %v1731, %v751
        %v1733 = vmax.f32 %v1732, %v753
        %v1734 = vmax.f32 %v1733, %v894
        %v1735 = vmax.f32 %v1734, %v896
        %v1736 = vmax.f32 %v1735, %v1037
        %v1737 = vmax.f32 %v1736, %v1039
        %v1738 = vmax.f32 %v1737, %v1180
        %v1739 = vmax.f32 %v1738, %v1182
        %v1740 = vmax.f32 %v1739, %v1323
        %v1741 = vmax.f32 %v1740, %v1325
        %v1742 = vmax.f32 %v1741, %v1466
        %v1743 = vmax.f32 %v1742, %v1468
        %v1744 = vmax.f32 %v1743, %v1609
        %v1745 = vmax.f32 %v1744, %v1611
        %1746 = vmax.xlane.f32.xlu0 %v1745
        %v1747 = vpop.xlane.xlu0 %1746
        %v1748 = vmax.f32 %v614, %v616
        %v1749 = vmax.f32 %v1748, %v757
        %v1750 = vmax.f32 %v1749, %v759
        %v1751 = vmax.f32 %v1750, %v900
        %v1752 = vmax.f32 %v1751, %v902
        %v1753 = vmax.f32 %v1752, %v1043
        %v1754 = vmax.f32 %v1753, %v1045
        %v1755 = vmax.f32 %v1754, %v1186
        %v1756 = vmax.f32 %v1755, %v1188
        %v1757 = vmax.f32 %v1756, %v1329
        %v1758 = vmax.f32 %v1757, %v1331
        %v1759 = vmax.f32 %v1758, %v1472
        %v1760 = vmax.f32 %v1759, %v1474
        %v1761 = vmax.f32 %v1760, %v1615
        %v1762 = vmax.f32 %v1761, %v1617
        %1763 = vmax.xlane.f32.xlu0 %v1762
        %v1764 = vpop.xlane.xlu0 %1763
        %v1765 = vmax.f32 %v620, %v622
        %v1766 = vmax.f32 %v1765, %v763
        %v1767 = vmax.f32 %v1766, %v765
        %v1768 = vmax.f32 %v1767, %v906
        %v1769 = vmax.f32 %v1768, %v908
        %v1770 = vmax.f32 %v1769, %v1049
        %v1771 = vmax.f32 %v1770, %v1051
        %v1772 = vmax.f32 %v1771, %v1192
        %v1773 = vmax.f32 %v1772, %v1194
        %v1774 = vmax.f32 %v1773, %v1335
        %v1775 = vmax.f32 %v1774, %v1337
        %v1776 = vmax.f32 %v1775, %v1478
        %v1777 = vmax.f32 %v1776, %v1480
        %v1778 = vmax.f32 %v1777, %v1621
        %v1779 = vmax.f32 %v1778, %v1623
        %1780 = vmax.xlane.f32.xlu0 %v1779
        %v1781 = vpop.xlane.xlu0 %1780
        %v1782 = vmax.f32 %v626, %v628
        %v1783 = vmax.f32 %v1782, %v769
        %v1784 = vmax.f32 %v1783, %v771
        %v1785 = vmax.f32 %v1784, %v912
        %v1786 = vmax.f32 %v1785, %v914
        %v1787 = vmax.f32 %v1786, %v1055
        %v1788 = vmax.f32 %v1787, %v1057
        %v1789 = vmax.f32 %v1788, %v1198
        %v1790 = vmax.f32 %v1789, %v1200
        %v1791 = vmax.f32 %v1790, %v1341
        %v1792 = vmax.f32 %v1791, %v1343
        %v1793 = vmax.f32 %v1792, %v1484
        %v1794 = vmax.f32 %v1793, %v1486
        %v1795 = vmax.f32 %v1794, %v1627
        %v1796 = vmax.f32 %v1795, %v1629
        %1797 = vmax.xlane.f32.xlu0 %v1796
        %v1798 = vpop.xlane.xlu0 %1797
        %v1799 = vmax.f32 %v632, %v634
        %v1800 = vmax.f32 %v1799, %v775
        %v1801 = vmax.f32 %v1800, %v777
        %v1802 = vmax.f32 %v1801, %v918
        %v1803 = vmax.f32 %v1802, %v920
        %v1804 = vmax.f32 %v1803, %v1061
        %v1805 = vmax.f32 %v1804, %v1063
        %v1806 = vmax.f32 %v1805, %v1204
        %v1807 = vmax.f32 %v1806, %v1206
        %v1808 = vmax.f32 %v1807, %v1347
        %v1809 = vmax.f32 %v1808, %v1349
        %v1810 = vmax.f32 %v1809, %v1490
        %v1811 = vmax.f32 %v1810, %v1492
        %v1812 = vmax.f32 %v1811, %v1633
        %v1813 = vmax.f32 %v1812, %v1635
        %1814 = vmax.xlane.f32.xlu0 %v1813
        %v1815 = vpop.xlane.xlu0 %1814
        %v1816 = vmax.f32 %v638, %v640
        %v1817 = vmax.f32 %v1816, %v781
        %v1818 = vmax.f32 %v1817, %v783
        %v1819 = vmax.f32 %v1818, %v924
        %v1820 = vmax.f32 %v1819, %v926
        %v1821 = vmax.f32 %v1820, %v1067
        %v1822 = vmax.f32 %v1821, %v1069
        %v1823 = vmax.f32 %v1822, %v1210
        %v1824 = vmax.f32 %v1823, %v1212
        %v1825 = vmax.f32 %v1824, %v1353
        %v1826 = vmax.f32 %v1825, %v1355
        %v1827 = vmax.f32 %v1826, %v1496
        %v1828 = vmax.f32 %v1827, %v1498
        %v1829 = vmax.f32 %v1828, %v1639
        %v1830 = vmax.f32 %v1829, %v1641
        %1831 = vmax.xlane.f32.xlu0 %v1830
        %v1832 = vpop.xlane.xlu0 %1831
        %v1833 = vmax.f32 %v644, %v646
        %v1834 = vmax.f32 %v1833, %v787
        %v1835 = vmax.f32 %v1834, %v789
        %v1836 = vmax.f32 %v1835, %v930
        %v1837 = vmax.f32 %v1836, %v932
        %v1838 = vmax.f32 %v1837, %v1073
        %v1839 = vmax.f32 %v1838, %v1075
        %v1840 = vmax.f32 %v1839, %v1216
        %v1841 = vmax.f32 %v1840, %v1218
        %v1842 = vmax.f32 %v1841, %v1359
        %v1843 = vmax.f32 %v1842, %v1361
        %v1844 = vmax.f32 %v1843, %v1502
        %v1845 = vmax.f32 %v1844, %v1504
        %v1846 = vmax.f32 %v1845, %v1645
        %v1847 = vmax.f32 %v1846, %v1647
        %1848 = vmax.xlane.f32.xlu0 %v1847
        %v1849 = vpop.xlane.xlu0 %1848
        %v1850 = vmax.f32 %v650, %v652
        %v1851 = vmax.f32 %v1850, %v793
        %v1852 = vmax.f32 %v1851, %v795
        %v1853 = vmax.f32 %v1852, %v936
        %v1854 = vmax.f32 %v1853, %v938
        %v1855 = vmax.f32 %v1854, %v1079
        %v1856 = vmax.f32 %v1855, %v1081
        %v1857 = vmax.f32 %v1856, %v1222
        %v1858 = vmax.f32 %v1857, %v1224
        %v1859 = vmax.f32 %v1858, %v1365
        %v1860 = vmax.f32 %v1859, %v1367
        %v1861 = vmax.f32 %v1860, %v1508
        %v1862 = vmax.f32 %v1861, %v1510
        %v1863 = vmax.f32 %v1862, %v1651
        %v1864 = vmax.f32 %v1863, %v1653
        %1865 = vmax.xlane.f32.xlu0 %v1864
        %v1866 = vpop.xlane.xlu0 %1865
        %v1867 = vmax.f32 %v656, %v658
        %v1868 = vmax.f32 %v1867, %v799
        %v1869 = vmax.f32 %v1868, %v801
        %v1870 = vmax.f32 %v1869, %v942
        %v1871 = vmax.f32 %v1870, %v944
        %v1872 = vmax.f32 %v1871, %v1085
        %v1873 = vmax.f32 %v1872, %v1087
        %v1874 = vmax.f32 %v1873, %v1228
        %v1875 = vmax.f32 %v1874, %v1230
        %v1876 = vmax.f32 %v1875, %v1371
        %v1877 = vmax.f32 %v1876, %v1373
        %v1878 = vmax.f32 %v1877, %v1514
        %v1879 = vmax.f32 %v1878, %v1516
        %v1880 = vmax.f32 %v1879, %v1657
        %v1881 = vmax.f32 %v1880, %v1659
        %1882 = vmax.xlane.f32.xlu0 %v1881
        %v1883 = vpop.xlane.xlu0 %1882
        %v1884 = vmax.f32 %v662, %v664
        %v1885 = vmax.f32 %v1884, %v805
        %v1886 = vmax.f32 %v1885, %v807
        %v1887 = vmax.f32 %v1886, %v948
        %v1888 = vmax.f32 %v1887, %v950
        %v1889 = vmax.f32 %v1888, %v1091
        %v1890 = vmax.f32 %v1889, %v1093
        %v1891 = vmax.f32 %v1890, %v1234
        %v1892 = vmax.f32 %v1891, %v1236
        %v1893 = vmax.f32 %v1892, %v1377
        %v1894 = vmax.f32 %v1893, %v1379
        %v1895 = vmax.f32 %v1894, %v1520
        %v1896 = vmax.f32 %v1895, %v1522
        %v1897 = vmax.f32 %v1896, %v1663
        %v1898 = vmax.f32 %v1897, %v1665
        %1899 = vmax.xlane.f32.xlu0 %v1898
        %v1900 = vpop.xlane.xlu0 %1899
        %v1901 = vmax.f32 %v1667, %v1696
        %v1902 = vmax.f32 %v1668, %v1713
        %v1903 = vmax.f32 %v1669, %v1730
        %v1904 = vmax.f32 %v1670, %v1747
        %v1905 = vmax.f32 %v1671, %v1764
        %v1906 = vmax.f32 %v1672, %v1781
        %v1907 = vmax.f32 %v1673, %v1798
        %v1908 = vmax.f32 %v1674, %v1815
        %v1909 = vmax.f32 %v1675, %v1832
        %v1910 = vmax.f32 %v1676, %v1849
        %v1911 = vmax.f32 %v1677, %v1866
        %v1912 = vmax.f32 %v1678, %v1883
        %v1913 = vmax.f32 %v1679, %v1900
        %v1914 = vsub.f32 %v1667, %v1901
        %v1915 = vsub.f32 %v1668, %v1902
        %v1916 = vsub.f32 %v1669, %v1903
        %v1917 = vsub.f32 %v1670, %v1904
        %v1918 = vsub.f32 %v1671, %v1905
        %v1919 = vsub.f32 %v1672, %v1906
        %v1920 = vsub.f32 %v1673, %v1907
        %v1921 = vsub.f32 %v1674, %v1908
        %v1922 = vsub.f32 %v1675, %v1909
        %v1923 = vsub.f32 %v1676, %v1910
        %v1924 = vsub.f32 %v1677, %v1911
        %v1925 = vsub.f32 %v1678, %v1912
        %v1926 = vsub.f32 %v1679, %v1913
        %v1927 = vmul.f32 %v1914, 1.442695
        %v1928 = vpow.pop %v1927
        %v1929 = vmul.f32 %v1915, 1.442695
        %v1930 = vpow.pop %v1929
        %v1931 = vmul.f32 %v1916, 1.442695
        %v1932 = vpow.pop %v1931
        %v1933 = vmul.f32 %v1917, 1.442695
        %v1934 = vpow.pop %v1933
        %v1935 = vmul.f32 %v1918, 1.442695
        %v1936 = vpow.pop %v1935
        %v1937 = vmul.f32 %v1919, 1.442695
        %v1938 = vpow.pop %v1937
        %v1939 = vmul.f32 %v1920, 1.442695
        %v1940 = vpow.pop %v1939
        %v1941 = vmul.f32 %v1921, 1.442695
        %v1942 = vpow.pop %v1941
        %v1943 = vmul.f32 %v1922, 1.442695
        %v1944 = vpow.pop %v1943
        %v1945 = vmul.f32 %v1923, 1.442695
        %v1946 = vpow.pop %v1945
        %v1947 = vmul.f32 %v1924, 1.442695
        %v1948 = vpow.pop %v1947
        %v1949 = vmul.f32 %v1925, 1.442695
        %v1950 = vpow.pop %v1949
        %v1951 = vmul.f32 %v1926, 1.442695
        %v1952 = vpow.pop %v1951
        %v1953 = vld [vmem:[#allocation3] sm:$0xff]
        %v1954 = vld [vmem:[#allocation3 + $0x8] sm:$0xff]
        %v1955 = vld [vmem:[#allocation3 + $0x10] sm:$0xff]
        %v1956 = vld [vmem:[#allocation3 + $0x18] sm:$0xff]
        %v1957 = vld [vmem:[#allocation3 + $0x20] sm:$0xff]
        %v1958 = vld [vmem:[#allocation3 + $0x28] sm:$0xff]
        %v1959 = vld [vmem:[#allocation3 + $0x30] sm:$0xff]
        %v1960 = vld [vmem:[#allocation3 + $0x38] sm:$0xff]
        %v1961 = vld [vmem:[#allocation3 + $0x40] sm:$0xff]
        %v1962 = vld [vmem:[#allocation3 + $0x48] sm:$0xff]
        %v1963 = vld [vmem:[#allocation3 + $0x50] sm:$0xff]
        %v1964 = vld [vmem:[#allocation3 + $0x58] sm:$0xff]
        %v1965 = vld [vmem:[#allocation3 + $0x60] sm:$0xff]
        %v1966 = vmul.f32 %v1928, %v1953
        %v1967 = vmul.f32 %v1930, %v1954
        %v1968 = vmul.f32 %v1932, %v1955
        %v1969 = vmul.f32 %v1934, %v1956
        %v1970 = vmul.f32 %v1936, %v1957
        %v1971 = vmul.f32 %v1938, %v1958
        %v1972 = vmul.f32 %v1940, %v1959
        %v1973 = vmul.f32 %v1942, %v1960
        %v1974 = vmul.f32 %v1944, %v1961
        %v1975 = vmul.f32 %v1946, %v1962
        %v1976 = vmul.f32 %v1948, %v1963
        %v1977 = vmul.f32 %v1950, %v1964
        %v1978 = vmul.f32 %v1952, %v1965
        %1980 = vset.pattern.permute.xlu0 0
        %1981 = vperm.xlu0 %1980, %v1901
        %v1982 = vpop.permute.xlu0 %1981
        %1985 = vset.pattern.permute.xlu0 0
        %1986 = vperm.xlu0 %1985, %v1902
        %v1987 = vpop.permute.xlu0 %1986
        %1990 = vset.pattern.permute.xlu0 0
        %1991 = vperm.xlu0 %1990, %v1903
        %v1992 = vpop.permute.xlu0 %1991
        %1995 = vset.pattern.permute.xlu0 0
        %1996 = vperm.xlu0 %1995, %v1904
        %v1997 = vpop.permute.xlu0 %1996
        %2000 = vset.pattern.permute.xlu0 0
        %2001 = vperm.xlu0 %2000, %v1905
        %v2002 = vpop.permute.xlu0 %2001
        %2005 = vset.pattern.permute.xlu0 0
        %2006 = vperm.xlu0 %2005, %v1906
        %v2007 = vpop.permute.xlu0 %2006
        %2010 = vset.pattern.permute.xlu0 0
        %2011 = vperm.xlu0 %2010, %v1907
        %v2012 = vpop.permute.xlu0 %2011
        %2015 = vset.pattern.permute.xlu0 0
        %2016 = vperm.xlu0 %2015, %v1908
        %v2017 = vpop.permute.xlu0 %2016
        %2020 = vset.pattern.permute.xlu0 0
        %2021 = vperm.xlu0 %2020, %v1909
        %v2022 = vpop.permute.xlu0 %2021
        %2025 = vset.pattern.permute.xlu0 0
        %2026 = vperm.xlu0 %2025, %v1910
        %v2027 = vpop.permute.xlu0 %2026
        %2030 = vset.pattern.permute.xlu0 0
        %2031 = vperm.xlu0 %2030, %v1911
        %v2032 = vpop.permute.xlu0 %2031
        %2035 = vset.pattern.permute.xlu0 0
        %2036 = vperm.xlu0 %2035, %v1912
        %v2037 = vpop.permute.xlu0 %2036
        %2040 = vset.pattern.permute.xlu0 0
        %2041 = vperm.xlu0 %2040, %v1913
        %v2042 = vpop.permute.xlu0 %2041
        %v2044 = vsub.f32 %v590, %v1982
        %v2045 = vsub.f32 %v592, %v1982
        %v2046 = vsub.f32 %v733, %v1982
        %v2047 = vsub.f32 %v735, %v1982
        %v2048 = vsub.f32 %v876, %v1982
        %v2049 = vsub.f32 %v878, %v1982
        %v2050 = vsub.f32 %v1019, %v1982
        %v2051 = vsub.f32 %v1021, %v1982
        %v2052 = vsub.f32 %v1162, %v1982
        %v2053 = vsub.f32 %v1164, %v1982
        %v2054 = vsub.f32 %v1305, %v1982
        %v2055 = vsub.f32 %v1307, %v1982
        %v2056 = vsub.f32 %v1448, %v1982
        %v2057 = vsub.f32 %v1450, %v1982
        %v2058 = vsub.f32 %v1591, %v1982
        %v2059 = vsub.f32 %v1593, %v1982
        %v2060 = vsub.f32 %v596, %v1987
        %v2061 = vsub.f32 %v598, %v1987
        %v2062 = vsub.f32 %v739, %v1987
        %v2063 = vsub.f32 %v741, %v1987
        %v2064 = vsub.f32 %v882, %v1987
        %v2065 = vsub.f32 %v884, %v1987
        %v2066 = vsub.f32 %v1025, %v1987
        %v2067 = vsub.f32 %v1027, %v1987
        %v2068 = vsub.f32 %v1168, %v1987
        %v2069 = vsub.f32 %v1170, %v1987
        %v2070 = vsub.f32 %v1311, %v1987
        %v2071 = vsub.f32 %v1313, %v1987
        %v2072 = vsub.f32 %v1454, %v1987
        %v2073 = vsub.f32 %v1456, %v1987
        %v2074 = vsub.f32 %v1597, %v1987
        %v2075 = vsub.f32 %v1599, %v1987
        %v2076 = vsub.f32 %v602, %v1992
        %v2077 = vsub.f32 %v604, %v1992
        %v2078 = vsub.f32 %v745, %v1992
        %v2079 = vsub.f32 %v747, %v1992
        %v2080 = vsub.f32 %v888, %v1992
        %v2081 = vsub.f32 %v890, %v1992
        %v2082 = vsub.f32 %v1031, %v1992
        %v2083 = vsub.f32 %v1033, %v1992
        %v2084 = vsub.f32 %v1174, %v1992
        %v2085 = vsub.f32 %v1176, %v1992
        %v2086 = vsub.f32 %v1317, %v1992
        %v2087 = vsub.f32 %v1319, %v1992
        %v2088 = vsub.f32 %v1460, %v1992
        %v2089 = vsub.f32 %v1462, %v1992
        %v2090 = vsub.f32 %v1603, %v1992
        %v2091 = vsub.f32 %v1605, %v1992
        %v2092 = vsub.f32 %v608, %v1997
        %v2093 = vsub.f32 %v610, %v1997
        %v2094 = vsub.f32 %v751, %v1997
        %v2095 = vsub.f32 %v753, %v1997
        %v2096 = vsub.f32 %v894, %v1997
        %v2097 = vsub.f32 %v896, %v1997
        %v2098 = vsub.f32 %v1037, %v1997
        %v2099 = vsub.f32 %v1039, %v1997
        %v2100 = vsub.f32 %v1180, %v1997
        %v2101 = vsub.f32 %v1182, %v1997
        %v2102 = vsub.f32 %v1323, %v1997
        %v2103 = vsub.f32 %v1325, %v1997
        %v2104 = vsub.f32 %v1466, %v1997
        %v2105 = vsub.f32 %v1468, %v1997
        %v2106 = vsub.f32 %v1609, %v1997
        %v2107 = vsub.f32 %v1611, %v1997
        %v2108 = vsub.f32 %v614, %v2002
        %v2109 = vsub.f32 %v616, %v2002
        %v2110 = vsub.f32 %v757, %v2002
        %v2111 = vsub.f32 %v759, %v2002
        %v2112 = vsub.f32 %v900, %v2002
        %v2113 = vsub.f32 %v902, %v2002
        %v2114 = vsub.f32 %v1043, %v2002
        %v2115 = vsub.f32 %v1045, %v2002
        %v2116 = vsub.f32 %v1186, %v2002
        %v2117 = vsub.f32 %v1188, %v2002
        %v2118 = vsub.f32 %v1329, %v2002
        %v2119 = vsub.f32 %v1331, %v2002
        %v2120 = vsub.f32 %v1472, %v2002
        %v2121 = vsub.f32 %v1474, %v2002
        %v2122 = vsub.f32 %v1615, %v2002
        %v2123 = vsub.f32 %v1617, %v2002
        %v2124 = vsub.f32 %v620, %v2007
        %v2125 = vsub.f32 %v622, %v2007
        %v2126 = vsub.f32 %v763, %v2007
        %v2127 = vsub.f32 %v765, %v2007
        %v2128 = vsub.f32 %v906, %v2007
        %v2129 = vsub.f32 %v908, %v2007
        %v2130 = vsub.f32 %v1049, %v2007
        %v2131 = vsub.f32 %v1051, %v2007
        %v2132 = vsub.f32 %v1192, %v2007
        %v2133 = vsub.f32 %v1194, %v2007
        %v2134 = vsub.f32 %v1335, %v2007
        %v2135 = vsub.f32 %v1337, %v2007
        %v2136 = vsub.f32 %v1478, %v2007
        %v2137 = vsub.f32 %v1480, %v2007
        %v2138 = vsub.f32 %v1621, %v2007
        %v2139 = vsub.f32 %v1623, %v2007
        %v2140 = vsub.f32 %v626, %v2012
        %v2141 = vsub.f32 %v628, %v2012
        %v2142 = vsub.f32 %v769, %v2012
        %v2143 = vsub.f32 %v771, %v2012
        %v2144 = vsub.f32 %v912, %v2012
        %v2145 = vsub.f32 %v914, %v2012
        %v2146 = vsub.f32 %v1055, %v2012
        %v2147 = vsub.f32 %v1057, %v2012
        %v2148 = vsub.f32 %v1198, %v2012
        %v2149 = vsub.f32 %v1200, %v2012
        %v2150 = vsub.f32 %v1341, %v2012
        %v2151 = vsub.f32 %v1343, %v2012
        %v2152 = vsub.f32 %v1484, %v2012
        %v2153 = vsub.f32 %v1486, %v2012
        %v2154 = vsub.f32 %v1627, %v2012
        %v2155 = vsub.f32 %v1629, %v2012
        %v2156 = vsub.f32 %v632, %v2017
        %v2157 = vsub.f32 %v634, %v2017
        %v2158 = vsub.f32 %v775, %v2017
        %v2159 = vsub.f32 %v777, %v2017
        %v2160 = vsub.f32 %v918, %v2017
        %v2161 = vsub.f32 %v920, %v2017
        %v2162 = vsub.f32 %v1061, %v2017
        %v2163 = vsub.f32 %v1063, %v2017
        %v2164 = vsub.f32 %v1204, %v2017
        %v2165 = vsub.f32 %v1206, %v2017
        %v2166 = vsub.f32 %v1347, %v2017
        %v2167 = vsub.f32 %v1349, %v2017
        %v2168 = vsub.f32 %v1490, %v2017
        %v2169 = vsub.f32 %v1492, %v2017
        %v2170 = vsub.f32 %v1633, %v2017
        %v2171 = vsub.f32 %v1635, %v2017
        %v2172 = vsub.f32 %v638, %v2022
        %v2173 = vsub.f32 %v640, %v2022
        %v2174 = vsub.f32 %v781, %v2022
        %v2175 = vsub.f32 %v783, %v2022
        %v2176 = vsub.f32 %v924, %v2022
        %v2177 = vsub.f32 %v926, %v2022
        %v2178 = vsub.f32 %v1067, %v2022
        %v2179 = vsub.f32 %v1069, %v2022
        %v2180 = vsub.f32 %v1210, %v2022
        %v2181 = vsub.f32 %v1212, %v2022
        %v2182 = vsub.f32 %v1353, %v2022
        %v2183 = vsub.f32 %v1355, %v2022
        %v2184 = vsub.f32 %v1496, %v2022
        %v2185 = vsub.f32 %v1498, %v2022
        %v2186 = vsub.f32 %v1639, %v2022
        %v2187 = vsub.f32 %v1641, %v2022
        %v2188 = vsub.f32 %v644, %v2027
        %v2189 = vsub.f32 %v646, %v2027
        %v2190 = vsub.f32 %v787, %v2027
        %v2191 = vsub.f32 %v789, %v2027
        %v2192 = vsub.f32 %v930, %v2027
        %v2193 = vsub.f32 %v932, %v2027
        %v2194 = vsub.f32 %v1073, %v2027
        %v2195 = vsub.f32 %v1075, %v2027
        %v2196 = vsub.f32 %v1216, %v2027
        %v2197 = vsub.f32 %v1218, %v2027
        %v2198 = vsub.f32 %v1359, %v2027
        %v2199 = vsub.f32 %v1361, %v2027
        %v2200 = vsub.f32 %v1502, %v2027
        %v2201 = vsub.f32 %v1504, %v2027
        %v2202 = vsub.f32 %v1645, %v2027
        %v2203 = vsub.f32 %v1647, %v2027
        %v2204 = vsub.f32 %v650, %v2032
        %v2205 = vsub.f32 %v652, %v2032
        %v2206 = vsub.f32 %v793, %v2032
        %v2207 = vsub.f32 %v795, %v2032
        %v2208 = vsub.f32 %v936, %v2032
        %v2209 = vsub.f32 %v938, %v2032
        %v2210 = vsub.f32 %v1079, %v2032
        %v2211 = vsub.f32 %v1081, %v2032
        %v2212 = vsub.f32 %v1222, %v2032
        %v2213 = vsub.f32 %v1224, %v2032
        %v2214 = vsub.f32 %v1365, %v2032
        %v2215 = vsub.f32 %v1367, %v2032
        %v2216 = vsub.f32 %v1508, %v2032
        %v2217 = vsub.f32 %v1510, %v2032
        %v2218 = vsub.f32 %v1651, %v2032
        %v2219 = vsub.f32 %v1653, %v2032
        %v2220 = vsub.f32 %v656, %v2037
        %v2221 = vsub.f32 %v658, %v2037
        %v2222 = vsub.f32 %v799, %v2037
        %v2223 = vsub.f32 %v801, %v2037
        %v2224 = vsub.f32 %v942, %v2037
        %v2225 = vsub.f32 %v944, %v2037
        %v2226 = vsub.f32 %v1085, %v2037
        %v2227 = vsub.f32 %v1087, %v2037
        %v2228 = vsub.f32 %v1228, %v2037
        %v2229 = vsub.f32 %v1230, %v2037
        %v2230 = vsub.f32 %v1371, %v2037
        %v2231 = vsub.f32 %v1373, %v2037
        %v2232 = vsub.f32 %v1514, %v2037
        %v2233 = vsub.f32 %v1516, %v2037
        %v2234 = vsub.f32 %v1657, %v2037
        %v2235 = vsub.f32 %v1659, %v2037
        %v2236 = vsub.f32 %v662, %v2042
        %v2237 = vsub.f32 %v664, %v2042
        %v2238 = vsub.f32 %v805, %v2042
        %v2239 = vsub.f32 %v807, %v2042
        %v2240 = vsub.f32 %v948, %v2042
        %v2241 = vsub.f32 %v950, %v2042
        %v2242 = vsub.f32 %v1091, %v2042
        %v2243 = vsub.f32 %v1093, %v2042
        %v2244 = vsub.f32 %v1234, %v2042
        %v2245 = vsub.f32 %v1236, %v2042
        %v2246 = vsub.f32 %v1377, %v2042
        %v2247 = vsub.f32 %v1379, %v2042
        %v2248 = vsub.f32 %v1520, %v2042
        %v2249 = vsub.f32 %v1522, %v2042
        %v2250 = vsub.f32 %v1663, %v2042
        %v2251 = vsub.f32 %v1665, %v2042
        %v2252 = vmul.f32 %v2044, 1.442695
        %v2253 = vpow.pop %v2252
        %v2254 = vmul.f32 %v2045, 1.442695
        %v2255 = vpow.pop %v2254
        %v2256 = vmul.f32 %v2046, 1.442695
        %v2257 = vpow.pop %v2256
        %v2258 = vmul.f32 %v2047, 1.442695
        %v2259 = vpow.pop %v2258
        %v2260 = vmul.f32 %v2048, 1.442695
        %v2261 = vpow.pop %v2260
        %v2262 = vmul.f32 %v2049, 1.442695
        %v2263 = vpow.pop %v2262
        %v2264 = vmul.f32 %v2050, 1.442695
        %v2265 = vpow.pop %v2264
        %v2266 = vmul.f32 %v2051, 1.442695
        %v2267 = vpow.pop %v2266
        %v2268 = vmul.f32 %v2052, 1.442695
        %v2269 = vpow.pop %v2268
        %v2270 = vmul.f32 %v2053, 1.442695
        %v2271 = vpow.pop %v2270
        %v2272 = vmul.f32 %v2054, 1.442695
        %v2273 = vpow.pop %v2272
        %v2274 = vmul.f32 %v2055, 1.442695
        %v2275 = vpow.pop %v2274
        %v2276 = vmul.f32 %v2056, 1.442695
        %v2277 = vpow.pop %v2276
        %v2278 = vmul.f32 %v2057, 1.442695
        %v2279 = vpow.pop %v2278
        %v2280 = vmul.f32 %v2058, 1.442695
        %v2281 = vpow.pop %v2280
        %v2282 = vmul.f32 %v2059, 1.442695
        %v2283 = vpow.pop %v2282
        %v2284 = vmul.f32 %v2060, 1.442695
        %v2285 = vpow.pop %v2284
        %v2286 = vmul.f32 %v2061, 1.442695
        %v2287 = vpow.pop %v2286
        %v2288 = vmul.f32 %v2062, 1.442695
        %v2289 = vpow.pop %v2288
        %v2290 = vmul.f32 %v2063, 1.442695
        %v2291 = vpow.pop %v2290
        %v2292 = vmul.f32 %v2064, 1.442695
        %v2293 = vpow.pop %v2292
        %v2294 = vmul.f32 %v2065, 1.442695
        %v2295 = vpow.pop %v2294
        %v2296 = vmul.f32 %v2066, 1.442695
        %v2297 = vpow.pop %v2296
        %v2298 = vmul.f32 %v2067, 1.442695
        %v2299 = vpow.pop %v2298
        %v2300 = vmul.f32 %v2068, 1.442695
        %v2301 = vpow.pop %v2300
        %v2302 = vmul.f32 %v2069, 1.442695
        %v2303 = vpow.pop %v2302
        %v2304 = vmul.f32 %v2070, 1.442695
        %v2305 = vpow.pop %v2304
        %v2306 = vmul.f32 %v2071, 1.442695
        %v2307 = vpow.pop %v2306
        %v2308 = vmul.f32 %v2072, 1.442695
        %v2309 = vpow.pop %v2308
        %v2310 = vmul.f32 %v2073, 1.442695
        %v2311 = vpow.pop %v2310
        %v2312 = vmul.f32 %v2074, 1.442695
        %v2313 = vpow.pop %v2312
        %v2314 = vmul.f32 %v2075, 1.442695
        %v2315 = vpow.pop %v2314
        %v2316 = vmul.f32 %v2076, 1.442695
        %v2317 = vpow.pop %v2316
        %v2318 = vmul.f32 %v2077, 1.442695
        %v2319 = vpow.pop %v2318
        %v2320 = vmul.f32 %v2078, 1.442695
        %v2321 = vpow.pop %v2320
        %v2322 = vmul.f32 %v2079, 1.442695
        %v2323 = vpow.pop %v2322
        %v2324 = vmul.f32 %v2080, 1.442695
        %v2325 = vpow.pop %v2324
        %v2326 = vmul.f32 %v2081, 1.442695
        %v2327 = vpow.pop %v2326
        %v2328 = vmul.f32 %v2082, 1.442695
        %v2329 = vpow.pop %v2328
        %v2330 = vmul.f32 %v2083, 1.442695
        %v2331 = vpow.pop %v2330
        %v2332 = vmul.f32 %v2084, 1.442695
        %v2333 = vpow.pop %v2332
        %v2334 = vmul.f32 %v2085, 1.442695
        %v2335 = vpow.pop %v2334
        %v2336 = vmul.f32 %v2086, 1.442695
        %v2337 = vpow.pop %v2336
        %v2338 = vmul.f32 %v2087, 1.442695
        %v2339 = vpow.pop %v2338
        %v2340 = vmul.f32 %v2088, 1.442695
        %v2341 = vpow.pop %v2340
        %v2342 = vmul.f32 %v2089, 1.442695
        %v2343 = vpow.pop %v2342
        %v2344 = vmul.f32 %v2090, 1.442695
        %v2345 = vpow.pop %v2344
        %v2346 = vmul.f32 %v2091, 1.442695
        %v2347 = vpow.pop %v2346
        %v2348 = vmul.f32 %v2092, 1.442695
        %v2349 = vpow.pop %v2348
        %v2350 = vmul.f32 %v2093, 1.442695
        %v2351 = vpow.pop %v2350
        %v2352 = vmul.f32 %v2094, 1.442695
        %v2353 = vpow.pop %v2352
        %v2354 = vmul.f32 %v2095, 1.442695
        %v2355 = vpow.pop %v2354
        %v2356 = vmul.f32 %v2096, 1.442695
        %v2357 = vpow.pop %v2356
        %v2358 = vmul.f32 %v2097, 1.442695
        %v2359 = vpow.pop %v2358
        %v2360 = vmul.f32 %v2098, 1.442695
        %v2361 = vpow.pop %v2360
        %v2362 = vmul.f32 %v2099, 1.442695
        %v2363 = vpow.pop %v2362
        %v2364 = vmul.f32 %v2100, 1.442695
        %v2365 = vpow.pop %v2364
        %v2366 = vmul.f32 %v2101, 1.442695
        %v2367 = vpow.pop %v2366
        %v2368 = vmul.f32 %v2102, 1.442695
        %v2369 = vpow.pop %v2368
        %v2370 = vmul.f32 %v2103, 1.442695
        %v2371 = vpow.pop %v2370
        %v2372 = vmul.f32 %v2104, 1.442695
        %v2373 = vpow.pop %v2372
        %v2374 = vmul.f32 %v2105, 1.442695
        %v2375 = vpow.pop %v2374
        %v2376 = vmul.f32 %v2106, 1.442695
        %v2377 = vpow.pop %v2376
        %v2378 = vmul.f32 %v2107, 1.442695
        %v2379 = vpow.pop %v2378
        %v2380 = vmul.f32 %v2108, 1.442695
        %v2381 = vpow.pop %v2380
        %v2382 = vmul.f32 %v2109, 1.442695
        %v2383 = vpow.pop %v2382
        %v2384 = vmul.f32 %v2110, 1.442695
        %v2385 = vpow.pop %v2384
        %v2386 = vmul.f32 %v2111, 1.442695
        %v2387 = vpow.pop %v2386
        %v2388 = vmul.f32 %v2112, 1.442695
        %v2389 = vpow.pop %v2388
        %v2390 = vmul.f32 %v2113, 1.442695
        %v2391 = vpow.pop %v2390
        %v2392 = vmul.f32 %v2114, 1.442695
        %v2393 = vpow.pop %v2392
        %v2394 = vmul.f32 %v2115, 1.442695
        %v2395 = vpow.pop %v2394
        %v2396 = vmul.f32 %v2116, 1.442695
        %v2397 = vpow.pop %v2396
        %v2398 = vmul.f32 %v2117, 1.442695
        %v2399 = vpow.pop %v2398
        %v2400 = vmul.f32 %v2118, 1.442695
        %v2401 = vpow.pop %v2400
        %v2402 = vmul.f32 %v2119, 1.442695
        %v2403 = vpow.pop %v2402
        %v2404 = vmul.f32 %v2120, 1.442695
        %v2405 = vpow.pop %v2404
        %v2406 = vmul.f32 %v2121, 1.442695
        %v2407 = vpow.pop %v2406
        %v2408 = vmul.f32 %v2122, 1.442695
        %v2409 = vpow.pop %v2408
        %v2410 = vmul.f32 %v2123, 1.442695
        %v2411 = vpow.pop %v2410
        %v2412 = vmul.f32 %v2124, 1.442695
        %v2413 = vpow.pop %v2412
        %v2414 = vmul.f32 %v2125, 1.442695
        %v2415 = vpow.pop %v2414
        %v2416 = vmul.f32 %v2126, 1.442695
        %v2417 = vpow.pop %v2416
        %v2418 = vmul.f32 %v2127, 1.442695
        %v2419 = vpow.pop %v2418
        %v2420 = vmul.f32 %v2128, 1.442695
        %v2421 = vpow.pop %v2420
        %v2422 = vmul.f32 %v2129, 1.442695
        %v2423 = vpow.pop %v2422
        %v2424 = vmul.f32 %v2130, 1.442695
        %v2425 = vpow.pop %v2424
        %v2426 = vmul.f32 %v2131, 1.442695
        %v2427 = vpow.pop %v2426
        %v2428 = vmul.f32 %v2132, 1.442695
        %v2429 = vpow.pop %v2428
        %v2430 = vmul.f32 %v2133, 1.442695
        %v2431 = vpow.pop %v2430
        %v2432 = vmul.f32 %v2134, 1.442695
        %v2433 = vpow.pop %v2432
        %v2434 = vmul.f32 %v2135, 1.442695
        %v2435 = vpow.pop %v2434
        %v2436 = vmul.f32 %v2136, 1.442695
        %v2437 = vpow.pop %v2436
        %v2438 = vmul.f32 %v2137, 1.442695
        %v2439 = vpow.pop %v2438
        %v2440 = vmul.f32 %v2138, 1.442695
        %v2441 = vpow.pop %v2440
        %v2442 = vmul.f32 %v2139, 1.442695
        %v2443 = vpow.pop %v2442
        %v2444 = vmul.f32 %v2140, 1.442695
        %v2445 = vpow.pop %v2444
        %v2446 = vmul.f32 %v2141, 1.442695
        %v2447 = vpow.pop %v2446
        %v2448 = vmul.f32 %v2142, 1.442695
        %v2449 = vpow.pop %v2448
        %v2450 = vmul.f32 %v2143, 1.442695
        %v2451 = vpow.pop %v2450
        %v2452 = vmul.f32 %v2144, 1.442695
        %v2453 = vpow.pop %v2452
        %v2454 = vmul.f32 %v2145, 1.442695
        %v2455 = vpow.pop %v2454
        %v2456 = vmul.f32 %v2146, 1.442695
        %v2457 = vpow.pop %v2456
        %v2458 = vmul.f32 %v2147, 1.442695
        %v2459 = vpow.pop %v2458
        %v2460 = vmul.f32 %v2148, 1.442695
        %v2461 = vpow.pop %v2460
        %v2462 = vmul.f32 %v2149, 1.442695
        %v2463 = vpow.pop %v2462
        %v2464 = vmul.f32 %v2150, 1.442695
        %v2465 = vpow.pop %v2464
        %v2466 = vmul.f32 %v2151, 1.442695
        %v2467 = vpow.pop %v2466
        %v2468 = vmul.f32 %v2152, 1.442695
        %v2469 = vpow.pop %v2468
        %v2470 = vmul.f32 %v2153, 1.442695
        %v2471 = vpow.pop %v2470
        %v2472 = vmul.f32 %v2154, 1.442695
        %v2473 = vpow.pop %v2472
        %v2474 = vmul.f32 %v2155, 1.442695
        %v2475 = vpow.pop %v2474
        %v2476 = vmul.f32 %v2156, 1.442695
        %v2477 = vpow.pop %v2476
        %v2478 = vmul.f32 %v2157, 1.442695
        %v2479 = vpow.pop %v2478
        %v2480 = vmul.f32 %v2158, 1.442695
        %v2481 = vpow.pop %v2480
        %v2482 = vmul.f32 %v2159, 1.442695
        %v2483 = vpow.pop %v2482
        %v2484 = vmul.f32 %v2160, 1.442695
        %v2485 = vpow.pop %v2484
        %v2486 = vmul.f32 %v2161, 1.442695
        %v2487 = vpow.pop %v2486
        %v2488 = vmul.f32 %v2162, 1.442695
        %v2489 = vpow.pop %v2488
        %v2490 = vmul.f32 %v2163, 1.442695
        %v2491 = vpow.pop %v2490
        %v2492 = vmul.f32 %v2164, 1.442695
        %v2493 = vpow.pop %v2492
        %v2494 = vmul.f32 %v2165, 1.442695
        %v2495 = vpow.pop %v2494
        %v2496 = vmul.f32 %v2166, 1.442695
        %v2497 = vpow.pop %v2496
        %v2498 = vmul.f32 %v2167, 1.442695
        %v2499 = vpow.pop %v2498
        %v2500 = vmul.f32 %v2168, 1.442695
        %v2501 = vpow.pop %v2500
        %v2502 = vmul.f32 %v2169, 1.442695
        %v2503 = vpow.pop %v2502
        %v2504 = vmul.f32 %v2170, 1.442695
        %v2505 = vpow.pop %v2504
        %v2506 = vmul.f32 %v2171, 1.442695
        %v2507 = vpow.pop %v2506
        %v2508 = vmul.f32 %v2172, 1.442695
        %v2509 = vpow.pop %v2508
        %v2510 = vmul.f32 %v2173, 1.442695
        %v2511 = vpow.pop %v2510
        %v2512 = vmul.f32 %v2174, 1.442695
        %v2513 = vpow.pop %v2512
        %v2514 = vmul.f32 %v2175, 1.442695
        %v2515 = vpow.pop %v2514
        %v2516 = vmul.f32 %v2176, 1.442695
        %v2517 = vpow.pop %v2516
        %v2518 = vmul.f32 %v2177, 1.442695
        %v2519 = vpow.pop %v2518
        %v2520 = vmul.f32 %v2178, 1.442695
        %v2521 = vpow.pop %v2520
        %v2522 = vmul.f32 %v2179, 1.442695
        %v2523 = vpow.pop %v2522
        %v2524 = vmul.f32 %v2180, 1.442695
        %v2525 = vpow.pop %v2524
        %v2526 = vmul.f32 %v2181, 1.442695
        %v2527 = vpow.pop %v2526
        %v2528 = vmul.f32 %v2182, 1.442695
        %v2529 = vpow.pop %v2528
        %v2530 = vmul.f32 %v2183, 1.442695
        %v2531 = vpow.pop %v2530
        %v2532 = vmul.f32 %v2184, 1.442695
        %v2533 = vpow.pop %v2532
        %v2534 = vmul.f32 %v2185, 1.442695
        %v2535 = vpow.pop %v2534
        %v2536 = vmul.f32 %v2186, 1.442695
        %v2537 = vpow.pop %v2536
        %v2538 = vmul.f32 %v2187, 1.442695
        %v2539 = vpow.pop %v2538
        %v2540 = vmul.f32 %v2188, 1.442695
        %v2541 = vpow.pop %v2540
        %v2542 = vmul.f32 %v2189, 1.442695
        %v2543 = vpow.pop %v2542
        %v2544 = vmul.f32 %v2190, 1.442695
        %v2545 = vpow.pop %v2544
        %v2546 = vmul.f32 %v2191, 1.442695
        %v2547 = vpow.pop %v2546
        %v2548 = vmul.f32 %v2192, 1.442695
        %v2549 = vpow.pop %v2548
        %v2550 = vmul.f32 %v2193, 1.442695
        %v2551 = vpow.pop %v2550
        %v2552 = vmul.f32 %v2194, 1.442695
        %v2553 = vpow.pop %v2552
        %v2554 = vmul.f32 %v2195, 1.442695
        %v2555 = vpow.pop %v2554
        %v2556 = vmul.f32 %v2196, 1.442695
        %v2557 = vpow.pop %v2556
        %v2558 = vmul.f32 %v2197, 1.442695
        %v2559 = vpow.pop %v2558
        %v2560 = vmul.f32 %v2198, 1.442695
        %v2561 = vpow.pop %v2560
        %v2562 = vmul.f32 %v2199, 1.442695
        %v2563 = vpow.pop %v2562
        %v2564 = vmul.f32 %v2200, 1.442695
        %v2565 = vpow.pop %v2564
        %v2566 = vmul.f32 %v2201, 1.442695
        %v2567 = vpow.pop %v2566
        %v2568 = vmul.f32 %v2202, 1.442695
        %v2569 = vpow.pop %v2568
        %v2570 = vmul.f32 %v2203, 1.442695
        %v2571 = vpow.pop %v2570
        %v2572 = vmul.f32 %v2204, 1.442695
        %v2573 = vpow.pop %v2572
        %v2574 = vmul.f32 %v2205, 1.442695
        %v2575 = vpow.pop %v2574
        %v2576 = vmul.f32 %v2206, 1.442695
        %v2577 = vpow.pop %v2576
        %v2578 = vmul.f32 %v2207, 1.442695
        %v2579 = vpow.pop %v2578
        %v2580 = vmul.f32 %v2208, 1.442695
        %v2581 = vpow.pop %v2580
        %v2582 = vmul.f32 %v2209, 1.442695
        %v2583 = vpow.pop %v2582
        %v2584 = vmul.f32 %v2210, 1.442695
        %v2585 = vpow.pop %v2584
        %v2586 = vmul.f32 %v2211, 1.442695
        %v2587 = vpow.pop %v2586
        %v2588 = vmul.f32 %v2212, 1.442695
        %v2589 = vpow.pop %v2588
        %v2590 = vmul.f32 %v2213, 1.442695
        %v2591 = vpow.pop %v2590
        %v2592 = vmul.f32 %v2214, 1.442695
        %v2593 = vpow.pop %v2592
        %v2594 = vmul.f32 %v2215, 1.442695
        %v2595 = vpow.pop %v2594
        %v2596 = vmul.f32 %v2216, 1.442695
        %v2597 = vpow.pop %v2596
        %v2598 = vmul.f32 %v2217, 1.442695
        %v2599 = vpow.pop %v2598
        %v2600 = vmul.f32 %v2218, 1.442695
        %v2601 = vpow.pop %v2600
        %v2602 = vmul.f32 %v2219, 1.442695
        %v2603 = vpow.pop %v2602
        %v2604 = vmul.f32 %v2220, 1.442695
        %v2605 = vpow.pop %v2604
        %v2606 = vmul.f32 %v2221, 1.442695
        %v2607 = vpow.pop %v2606
        %v2608 = vmul.f32 %v2222, 1.442695
        %v2609 = vpow.pop %v2608
        %v2610 = vmul.f32 %v2223, 1.442695
        %v2611 = vpow.pop %v2610
        %v2612 = vmul.f32 %v2224, 1.442695
        %v2613 = vpow.pop %v2612
        %v2614 = vmul.f32 %v2225, 1.442695
        %v2615 = vpow.pop %v2614
        %v2616 = vmul.f32 %v2226, 1.442695
        %v2617 = vpow.pop %v2616
        %v2618 = vmul.f32 %v2227, 1.442695
        %v2619 = vpow.pop %v2618
        %v2620 = vmul.f32 %v2228, 1.442695
        %v2621 = vpow.pop %v2620
        %v2622 = vmul.f32 %v2229, 1.442695
        %v2623 = vpow.pop %v2622
        %v2624 = vmul.f32 %v2230, 1.442695
        %v2625 = vpow.pop %v2624
        %v2626 = vmul.f32 %v2231, 1.442695
        %v2627 = vpow.pop %v2626
        %v2628 = vmul.f32 %v2232, 1.442695
        %v2629 = vpow.pop %v2628
        %v2630 = vmul.f32 %v2233, 1.442695
        %v2631 = vpow.pop %v2630
        %v2632 = vmul.f32 %v2234, 1.442695
        %v2633 = vpow.pop %v2632
        %v2634 = vmul.f32 %v2235, 1.442695
        %v2635 = vpow.pop %v2634
        %v2636 = vmul.f32 %v2236, 1.442695
        %v2637 = vpow.pop %v2636
        %v2638 = vmul.f32 %v2237, 1.442695
        %v2639 = vpow.pop %v2638
        %v2640 = vmul.f32 %v2238, 1.442695
        %v2641 = vpow.pop %v2640
        %v2642 = vmul.f32 %v2239, 1.442695
        %v2643 = vpow.pop %v2642
        %v2644 = vmul.f32 %v2240, 1.442695
        %v2645 = vpow.pop %v2644
        %v2646 = vmul.f32 %v2241, 1.442695
        %v2647 = vpow.pop %v2646
        %v2648 = vmul.f32 %v2242, 1.442695
        %v2649 = vpow.pop %v2648
        %v2650 = vmul.f32 %v2243, 1.442695
        %v2651 = vpow.pop %v2650
        %v2652 = vmul.f32 %v2244, 1.442695
        %v2653 = vpow.pop %v2652
        %v2654 = vmul.f32 %v2245, 1.442695
        %v2655 = vpow.pop %v2654
        %v2656 = vmul.f32 %v2246, 1.442695
        %v2657 = vpow.pop %v2656
        %v2658 = vmul.f32 %v2247, 1.442695
        %v2659 = vpow.pop %v2658
        %v2660 = vmul.f32 %v2248, 1.442695
        %v2661 = vpow.pop %v2660
        %v2662 = vmul.f32 %v2249, 1.442695
        %v2663 = vpow.pop %v2662
        %v2664 = vmul.f32 %v2250, 1.442695
        %v2665 = vpow.pop %v2664
        %v2666 = vmul.f32 %v2251, 1.442695
        %v2667 = vpow.pop %v2666
        %v2668 = vadd.f32 %v2253, %v2255
        %v2669 = vadd.f32 %v2668, %v2257
        %v2670 = vadd.f32 %v2669, %v2259
        %v2671 = vadd.f32 %v2670, %v2261
        %v2672 = vadd.f32 %v2671, %v2263
        %v2673 = vadd.f32 %v2672, %v2265
        %v2674 = vadd.f32 %v2673, %v2267
        %v2675 = vadd.f32 %v2674, %v2269
        %v2676 = vadd.f32 %v2675, %v2271
        %v2677 = vadd.f32 %v2676, %v2273
        %v2678 = vadd.f32 %v2677, %v2275
        %v2679 = vadd.f32 %v2678, %v2277
        %v2680 = vadd.f32 %v2679, %v2279
        %v2681 = vadd.f32 %v2680, %v2281
        %v2682 = vadd.f32 %v2681, %v2283
        %2683 = vadd.xlane.f32.xlu0 %v2682
        %v2684 = vpop.xlane.xlu0 %2683
        %v2685 = vadd.f32 %v2285, %v2287
        %v2686 = vadd.f32 %v2685, %v2289
        %v2687 = vadd.f32 %v2686, %v2291
        %v2688 = vadd.f32 %v2687, %v2293
        %v2689 = vadd.f32 %v2688, %v2295
        %v2690 = vadd.f32 %v2689, %v2297
        %v2691 = vadd.f32 %v2690, %v2299
        %v2692 = vadd.f32 %v2691, %v2301
        %v2693 = vadd.f32 %v2692, %v2303
        %v2694 = vadd.f32 %v2693, %v2305
        %v2695 = vadd.f32 %v2694, %v2307
        %v2696 = vadd.f32 %v2695, %v2309
        %v2697 = vadd.f32 %v2696, %v2311
        %v2698 = vadd.f32 %v2697, %v2313
        %v2699 = vadd.f32 %v2698, %v2315
        %2700 = vadd.xlane.f32.xlu0 %v2699
        %v2701 = vpop.xlane.xlu0 %2700
        %v2702 = vadd.f32 %v2317, %v2319
        %v2703 = vadd.f32 %v2702, %v2321
        %v2704 = vadd.f32 %v2703, %v2323
        %v2705 = vadd.f32 %v2704, %v2325
        %v2706 = vadd.f32 %v2705, %v2327
        %v2707 = vadd.f32 %v2706, %v2329
        %v2708 = vadd.f32 %v2707, %v2331
        %v2709 = vadd.f32 %v2708, %v2333
        %v2710 = vadd.f32 %v2709, %v2335
        %v2711 = vadd.f32 %v2710, %v2337
        %v2712 = vadd.f32 %v2711, %v2339
        %v2713 = vadd.f32 %v2712, %v2341
        %v2714 = vadd.f32 %v2713, %v2343
        %v2715 = vadd.f32 %v2714, %v2345
        %v2716 = vadd.f32 %v2715, %v2347
        %2717 = vadd.xlane.f32.xlu0 %v2716
        %v2718 = vpop.xlane.xlu0 %2717
        %v2719 = vadd.f32 %v2349, %v2351
        %v2720 = vadd.f32 %v2719, %v2353
        %v2721 = vadd.f32 %v2720, %v2355
        %v2722 = vadd.f32 %v2721, %v2357
        %v2723 = vadd.f32 %v2722, %v2359
        %v2724 = vadd.f32 %v2723, %v2361
        %v2725 = vadd.f32 %v2724, %v2363
        %v2726 = vadd.f32 %v2725, %v2365
        %v2727 = vadd.f32 %v2726, %v2367
        %v2728 = vadd.f32 %v2727, %v2369
        %v2729 = vadd.f32 %v2728, %v2371
        %v2730 = vadd.f32 %v2729, %v2373
        %v2731 = vadd.f32 %v2730, %v2375
        %v2732 = vadd.f32 %v2731, %v2377
        %v2733 = vadd.f32 %v2732, %v2379
        %2734 = vadd.xlane.f32.xlu0 %v2733
        %v2735 = vpop.xlane.xlu0 %2734
        %v2736 = vadd.f32 %v2381, %v2383
        %v2737 = vadd.f32 %v2736, %v2385
        %v2738 = vadd.f32 %v2737, %v2387
        %v2739 = vadd.f32 %v2738, %v2389
        %v2740 = vadd.f32 %v2739, %v2391
        %v2741 = vadd.f32 %v2740, %v2393
        %v2742 = vadd.f32 %v2741, %v2395
        %v2743 = vadd.f32 %v2742, %v2397
        %v2744 = vadd.f32 %v2743, %v2399
        %v2745 = vadd.f32 %v2744, %v2401
        %v2746 = vadd.f32 %v2745, %v2403
        %v2747 = vadd.f32 %v2746, %v2405
        %v2748 = vadd.f32 %v2747, %v2407
        %v2749 = vadd.f32 %v2748, %v2409
        %v2750 = vadd.f32 %v2749, %v2411
        %2751 = vadd.xlane.f32.xlu0 %v2750
        %v2752 = vpop.xlane.xlu0 %2751
        %v2753 = vadd.f32 %v2413, %v2415
        %v2754 = vadd.f32 %v2753, %v2417
        %v2755 = vadd.f32 %v2754, %v2419
        %v2756 = vadd.f32 %v2755, %v2421
        %v2757 = vadd.f32 %v2756, %v2423
        %v2758 = vadd.f32 %v2757, %v2425
        %v2759 = vadd.f32 %v2758, %v2427
        %v2760 = vadd.f32 %v2759, %v2429
        %v2761 = vadd.f32 %v2760, %v2431
        %v2762 = vadd.f32 %v2761, %v2433
        %v2763 = vadd.f32 %v2762, %v2435
        %v2764 = vadd.f32 %v2763, %v2437
        %v2765 = vadd.f32 %v2764, %v2439
        %v2766 = vadd.f32 %v2765, %v2441
        %v2767 = vadd.f32 %v2766, %v2443
        %2768 = vadd.xlane.f32.xlu0 %v2767
        %v2769 = vpop.xlane.xlu0 %2768
        %v2770 = vadd.f32 %v2445, %v2447
        %v2771 = vadd.f32 %v2770, %v2449
        %v2772 = vadd.f32 %v2771, %v2451
        %v2773 = vadd.f32 %v2772, %v2453
        %v2774 = vadd.f32 %v2773, %v2455
        %v2775 = vadd.f32 %v2774, %v2457
        %v2776 = vadd.f32 %v2775, %v2459
        %v2777 = vadd.f32 %v2776, %v2461
        %v2778 = vadd.f32 %v2777, %v2463
        %v2779 = vadd.f32 %v2778, %v2465
        %v2780 = vadd.f32 %v2779, %v2467
        %v2781 = vadd.f32 %v2780, %v2469
        %v2782 = vadd.f32 %v2781, %v2471
        %v2783 = vadd.f32 %v2782, %v2473
        %v2784 = vadd.f32 %v2783, %v2475
        %2785 = vadd.xlane.f32.xlu0 %v2784
        %v2786 = vpop.xlane.xlu0 %2785
        %v2787 = vadd.f32 %v2477, %v2479
        %v2788 = vadd.f32 %v2787, %v2481
        %v2789 = vadd.f32 %v2788, %v2483
        %v2790 = vadd.f32 %v2789, %v2485
        %v2791 = vadd.f32 %v2790, %v2487
        %v2792 = vadd.f32 %v2791, %v2489
        %v2793 = vadd.f32 %v2792, %v2491
        %v2794 = vadd.f32 %v2793, %v2493
        %v2795 = vadd.f32 %v2794, %v2495
        %v2796 = vadd.f32 %v2795, %v2497
        %v2797 = vadd.f32 %v2796, %v2499
        %v2798 = vadd.f32 %v2797, %v2501
        %v2799 = vadd.f32 %v2798, %v2503
        %v2800 = vadd.f32 %v2799, %v2505
        %v2801 = vadd.f32 %v2800, %v2507
        %2802 = vadd.xlane.f32.xlu0 %v2801
        %v2803 = vpop.xlane.xlu0 %2802
        %v2804 = vadd.f32 %v2509, %v2511
        %v2805 = vadd.f32 %v2804, %v2513
        %v2806 = vadd.f32 %v2805, %v2515
        %v2807 = vadd.f32 %v2806, %v2517
        %v2808 = vadd.f32 %v2807, %v2519
        %v2809 = vadd.f32 %v2808, %v2521
        %v2810 = vadd.f32 %v2809, %v2523
        %v2811 = vadd.f32 %v2810, %v2525
        %v2812 = vadd.f32 %v2811, %v2527
        %v2813 = vadd.f32 %v2812, %v2529
        %v2814 = vadd.f32 %v2813, %v2531
        %v2815 = vadd.f32 %v2814, %v2533
        %v2816 = vadd.f32 %v2815, %v2535
        %v2817 = vadd.f32 %v2816, %v2537
        %v2818 = vadd.f32 %v2817, %v2539
        %2819 = vadd.xlane.f32.xlu0 %v2818
        %v2820 = vpop.xlane.xlu0 %2819
        %v2821 = vadd.f32 %v2541, %v2543
        %v2822 = vadd.f32 %v2821, %v2545
        %v2823 = vadd.f32 %v2822, %v2547
        %v2824 = vadd.f32 %v2823, %v2549
        %v2825 = vadd.f32 %v2824, %v2551
        %v2826 = vadd.f32 %v2825, %v2553
        %v2827 = vadd.f32 %v2826, %v2555
        %v2828 = vadd.f32 %v2827, %v2557
        %v2829 = vadd.f32 %v2828, %v2559
        %v2830 = vadd.f32 %v2829, %v2561
        %v2831 = vadd.f32 %v2830, %v2563
        %v2832 = vadd.f32 %v2831, %v2565
        %v2833 = vadd.f32 %v2832, %v2567
        %v2834 = vadd.f32 %v2833, %v2569
        %v2835 = vadd.f32 %v2834, %v2571
        %2836 = vadd.xlane.f32.xlu0 %v2835
        %v2837 = vpop.xlane.xlu0 %2836
        %v2838 = vadd.f32 %v2573, %v2575
        %v2839 = vadd.f32 %v2838, %v2577
        %v2840 = vadd.f32 %v2839, %v2579
        %v2841 = vadd.f32 %v2840, %v2581
        %v2842 = vadd.f32 %v2841, %v2583
        %v2843 = vadd.f32 %v2842, %v2585
        %v2844 = vadd.f32 %v2843, %v2587
        %v2845 = vadd.f32 %v2844, %v2589
        %v2846 = vadd.f32 %v2845, %v2591
        %v2847 = vadd.f32 %v2846, %v2593
        %v2848 = vadd.f32 %v2847, %v2595
        %v2849 = vadd.f32 %v2848, %v2597
        %v2850 = vadd.f32 %v2849, %v2599
        %v2851 = vadd.f32 %v2850, %v2601
        %v2852 = vadd.f32 %v2851, %v2603
        %2853 = vadd.xlane.f32.xlu0 %v2852
        %v2854 = vpop.xlane.xlu0 %2853
        %v2855 = vadd.f32 %v2605, %v2607
        %v2856 = vadd.f32 %v2855, %v2609
        %v2857 = vadd.f32 %v2856, %v2611
        %v2858 = vadd.f32 %v2857, %v2613
        %v2859 = vadd.f32 %v2858, %v2615
        %v2860 = vadd.f32 %v2859, %v2617
        %v2861 = vadd.f32 %v2860, %v2619
        %v2862 = vadd.f32 %v2861, %v2621
        %v2863 = vadd.f32 %v2862, %v2623
        %v2864 = vadd.f32 %v2863, %v2625
        %v2865 = vadd.f32 %v2864, %v2627
        %v2866 = vadd.f32 %v2865, %v2629
        %v2867 = vadd.f32 %v2866, %v2631
        %v2868 = vadd.f32 %v2867, %v2633
        %v2869 = vadd.f32 %v2868, %v2635
        %2870 = vadd.xlane.f32.xlu0 %v2869
        %v2871 = vpop.xlane.xlu0 %2870
        %v2872 = vadd.f32 %v2637, %v2639
        %v2873 = vadd.f32 %v2872, %v2641
        %v2874 = vadd.f32 %v2873, %v2643
        %v2875 = vadd.f32 %v2874, %v2645
        %v2876 = vadd.f32 %v2875, %v2647
        %v2877 = vadd.f32 %v2876, %v2649
        %v2878 = vadd.f32 %v2877, %v2651
        %v2879 = vadd.f32 %v2878, %v2653
        %v2880 = vadd.f32 %v2879, %v2655
        %v2881 = vadd.f32 %v2880, %v2657
        %v2882 = vadd.f32 %v2881, %v2659
        %v2883 = vadd.f32 %v2882, %v2661
        %v2884 = vadd.f32 %v2883, %v2663
        %v2885 = vadd.f32 %v2884, %v2665
        %v2886 = vadd.f32 %v2885, %v2667
        %2887 = vadd.xlane.f32.xlu0 %v2886
        %v2888 = vpop.xlane.xlu0 %2887
        %v2889 = vadd.f32 %v1966, %v2684
        %v2890 = vadd.f32 %v1967, %v2701
        %v2891 = vadd.f32 %v1968, %v2718
        %v2892 = vadd.f32 %v1969, %v2735
        %v2893 = vadd.f32 %v1970, %v2752
        %v2894 = vadd.f32 %v1971, %v2769
        %v2895 = vadd.f32 %v1972, %v2786
        %v2896 = vadd.f32 %v1973, %v2803
        %v2897 = vadd.f32 %v1974, %v2820
        %v2898 = vadd.f32 %v1975, %v2837
        %v2899 = vadd.f32 %v1976, %v2854
        %v2900 = vadd.f32 %v1977, %v2871
        %v2901 = vadd.f32 %v1978, %v2888
        %vm2902 = vcmask 7168
        %2903 = vst.msk [vmem:[#allocation3] sm:$0xff] %vm2902, %v2889
        %2904 = vst.msk [vmem:[#allocation3 + $0x8] sm:$0xff] %vm2902, %v2890
        %2905 = vst.msk [vmem:[#allocation3 + $0x10] sm:$0xff] %vm2902, %v2891
        %2906 = vst.msk [vmem:[#allocation3 + $0x18] sm:$0xff] %vm2902, %v2892
        %2907 = vst.msk [vmem:[#allocation3 + $0x20] sm:$0xff] %vm2902, %v2893
        %2908 = vst.msk [vmem:[#allocation3 + $0x28] sm:$0xff] %vm2902, %v2894
        %2909 = vst.msk [vmem:[#allocation3 + $0x30] sm:$0xff] %vm2902, %v2895
        %2910 = vst.msk [vmem:[#allocation3 + $0x38] sm:$0xff] %vm2902, %v2896
        %2911 = vst.msk [vmem:[#allocation3 + $0x40] sm:$0xff] %vm2902, %v2897
        %2912 = vst.msk [vmem:[#allocation3 + $0x48] sm:$0xff] %vm2902, %v2898
        %2913 = vst.msk [vmem:[#allocation3 + $0x50] sm:$0xff] %vm2902, %v2899
        %2914 = vst.msk [vmem:[#allocation3 + $0x58] sm:$0xff] %vm2902, %v2900
        %2915 = vst.msk [vmem:[#allocation3 + $0x60] sm:$0xff] %vm2902, %v2901
        %2916 = vst.msk [vmem:[#allocation2] sm:$0xff] %vm2902, %v1901
        %2917 = vst.msk [vmem:[#allocation2 + $0x8] sm:$0xff] %vm2902, %v1902
        %2918 = vst.msk [vmem:[#allocation2 + $0x10] sm:$0xff] %vm2902, %v1903
        %2919 = vst.msk [vmem:[#allocation2 + $0x18] sm:$0xff] %vm2902, %v1904
        %2920 = vst.msk [vmem:[#allocation2 + $0x20] sm:$0xff] %vm2902, %v1905
        %2921 = vst.msk [vmem:[#allocation2 + $0x28] sm:$0xff] %vm2902, %v1906
        %2922 = vst.msk [vmem:[#allocation2 + $0x30] sm:$0xff] %vm2902, %v1907
        %2923 = vst.msk [vmem:[#allocation2 + $0x38] sm:$0xff] %vm2902, %v1908
        %2924 = vst.msk [vmem:[#allocation2 + $0x40] sm:$0xff] %vm2902, %v1909
        %2925 = vst.msk [vmem:[#allocation2 + $0x48] sm:$0xff] %vm2902, %v1910
        %2926 = vst.msk [vmem:[#allocation2 + $0x50] sm:$0xff] %vm2902, %v1911
        %2927 = vst.msk [vmem:[#allocation2 + $0x58] sm:$0xff] %vm2902, %v1912
        %2928 = vst.msk [vmem:[#allocation2 + $0x60] sm:$0xff] %vm2902, %v1913
        // Predicated region
        $region41: #{tpu_custom_call.1} parent=31 // pred_check
          %p2929 = pneg %p227
        $region42: #{tpu_custom_call.1} parent=31 // pred_check_branch
          %2931 = sbr.rel (%p2929) target = $region44
        $region43: #{tpu_custom_call.1} parent=31 // pred_region
          %v2932 = vld [vmem:[#allocation2] sm:$0xff]
          %v2933 = vld [vmem:[#allocation2 + $0x8] sm:$0xff]
          %v2934 = vld [vmem:[#allocation2 + $0x10] sm:$0xff]
          %v2935 = vld [vmem:[#allocation2 + $0x18] sm:$0xff]
          %v2936 = vld [vmem:[#allocation2 + $0x20] sm:$0xff]
          %v2937 = vld [vmem:[#allocation2 + $0x28] sm:$0xff]
          %v2938 = vld [vmem:[#allocation2 + $0x30] sm:$0xff]
          %v2939 = vld [vmem:[#allocation2 + $0x38] sm:$0xff]
          %v2940 = vld [vmem:[#allocation2 + $0x40] sm:$0xff]
          %v2941 = vld [vmem:[#allocation2 + $0x48] sm:$0xff]
          %v2942 = vld [vmem:[#allocation2 + $0x50] sm:$0xff]
          %v2943 = vld [vmem:[#allocation2 + $0x58] sm:$0xff]
          %v2944 = vld [vmem:[#allocation2 + $0x60] sm:$0xff]
          %v2945 = vld [vmem:[#allocation3] sm:$0xff]
          %v2946 = vld [vmem:[#allocation3 + $0x8] sm:$0xff]
          %v2947 = vld [vmem:[#allocation3 + $0x10] sm:$0xff]
          %v2948 = vld [vmem:[#allocation3 + $0x18] sm:$0xff]
          %v2949 = vld [vmem:[#allocation3 + $0x20] sm:$0xff]
          %v2950 = vld [vmem:[#allocation3 + $0x28] sm:$0xff]
          %v2951 = vld [vmem:[#allocation3 + $0x30] sm:$0xff]
          %v2952 = vld [vmem:[#allocation3 + $0x38] sm:$0xff]
          %v2953 = vld [vmem:[#allocation3 + $0x40] sm:$0xff]
          %v2954 = vld [vmem:[#allocation3 + $0x48] sm:$0xff]
          %v2955 = vld [vmem:[#allocation3 + $0x50] sm:$0xff]
          %v2956 = vld [vmem:[#allocation3 + $0x58] sm:$0xff]
          %v2957 = vld [vmem:[#allocation3 + $0x60] sm:$0xff]
          %v2958 = vlog2.pop %v2945
          %v2959 = vmul.f32 %v2958, 0.6931472
          %v2960 = vlog2.pop %v2946
          %v2961 = vmul.f32 %v2960, 0.6931472
          %v2962 = vlog2.pop %v2947
          %v2963 = vmul.f32 %v2962, 0.6931472
          %v2964 = vlog2.pop %v2948
          %v2965 = vmul.f32 %v2964, 0.6931472
          %v2966 = vlog2.pop %v2949
          %v2967 = vmul.f32 %v2966, 0.6931472
          %v2968 = vlog2.pop %v2950
          %v2969 = vmul.f32 %v2968, 0.6931472
          %v2970 = vlog2.pop %v2951
          %v2971 = vmul.f32 %v2970, 0.6931472
          %v2972 = vlog2.pop %v2952
          %v2973 = vmul.f32 %v2972, 0.6931472
          %v2974 = vlog2.pop %v2953
          %v2975 = vmul.f32 %v2974, 0.6931472
          %v2976 = vlog2.pop %v2954
          %v2977 = vmul.f32 %v2976, 0.6931472
          %v2978 = vlog2.pop %v2955
          %v2979 = vmul.f32 %v2978, 0.6931472
          %v2980 = vlog2.pop %v2956
          %v2981 = vmul.f32 %v2980, 0.6931472
          %v2982 = vlog2.pop %v2957
          %v2983 = vmul.f32 %v2982, 0.6931472
          %v2984 = vadd.f32 %v2932, %v2959
          %v2985 = vadd.f32 %v2933, %v2961
          %v2986 = vadd.f32 %v2934, %v2963
          %v2987 = vadd.f32 %v2935, %v2965
          %v2988 = vadd.f32 %v2936, %v2967
          %v2989 = vadd.f32 %v2937, %v2969
          %v2990 = vadd.f32 %v2938, %v2971
          %v2991 = vadd.f32 %v2939, %v2973
          %v2992 = vadd.f32 %v2940, %v2975
          %v2993 = vadd.f32 %v2941, %v2977
          %v2994 = vadd.f32 %v2942, %v2979
          %v2995 = vadd.f32 %v2943, %v2981
          %v2996 = vadd.f32 %v2944, %v2983
          %2998 = vset.pattern.permute.xlu0 0
          %2999 = vperm.xlu0 %2998, %v2984
          %v3000 = vpop.permute.xlu0 %2999
          %3003 = vset.pattern.permute.xlu0 0
          %3004 = vperm.xlu0 %3003, %v2985
          %v3005 = vpop.permute.xlu0 %3004
          %3008 = vset.pattern.permute.xlu0 0
          %3009 = vperm.xlu0 %3008, %v2986
          %v3010 = vpop.permute.xlu0 %3009
          %3013 = vset.pattern.permute.xlu0 0
          %3014 = vperm.xlu0 %3013, %v2987
          %v3015 = vpop.permute.xlu0 %3014
          %3018 = vset.pattern.permute.xlu0 0
          %3019 = vperm.xlu0 %3018, %v2988
          %v3020 = vpop.permute.xlu0 %3019
          %3023 = vset.pattern.permute.xlu0 0
          %3024 = vperm.xlu0 %3023, %v2989
          %v3025 = vpop.permute.xlu0 %3024
          %3028 = vset.pattern.permute.xlu0 0
          %3029 = vperm.xlu0 %3028, %v2990
          %v3030 = vpop.permute.xlu0 %3029
          %3033 = vset.pattern.permute.xlu0 0
          %3034 = vperm.xlu0 %3033, %v2991
          %v3035 = vpop.permute.xlu0 %3034
          %3038 = vset.pattern.permute.xlu0 0
          %3039 = vperm.xlu0 %3038, %v2992
          %v3040 = vpop.permute.xlu0 %3039
          %3043 = vset.pattern.permute.xlu0 0
          %3044 = vperm.xlu0 %3043, %v2993
          %v3045 = vpop.permute.xlu0 %3044
          %3048 = vset.pattern.permute.xlu0 0
          %3049 = vperm.xlu0 %3048, %v2994
          %v3050 = vpop.permute.xlu0 %3049
          %3053 = vset.pattern.permute.xlu0 0
          %3054 = vperm.xlu0 %3053, %v2995
          %v3055 = vpop.permute.xlu0 %3054
          %3058 = vset.pattern.permute.xlu0 0
          %3059 = vperm.xlu0 %3058, %v2996
          %v3060 = vpop.permute.xlu0 %3059
          %3062 = vst [vmem:[%s213] sm:$0xff] %v3000
          %3063 = vst [vmem:[%s213 + $0x8] sm:$0xff] %v3005
          %3064 = vst [vmem:[%s213 + $0x10] sm:$0xff] %v3010
          %3065 = vst [vmem:[%s213 + $0x18] sm:$0xff] %v3015
          %3066 = vst [vmem:[%s213 + $0x20] sm:$0xff] %v3020
          %3067 = vst [vmem:[%s213 + $0x28] sm:$0xff] %v3025
          %3068 = vst [vmem:[%s213 + $0x30] sm:$0xff] %v3030
          %3069 = vst [vmem:[%s213 + $0x38] sm:$0xff] %v3035
          %3070 = vst [vmem:[%s213 + $0x40] sm:$0xff] %v3040
          %3071 = vst [vmem:[%s213 + $0x48] sm:$0xff] %v3045
          %3072 = vst [vmem:[%s213 + $0x50] sm:$0xff] %v3050
          %3073 = vst [vmem:[%s213 + $0x58] sm:$0xff] %v3055
          %3074 = vst [vmem:[%s213 + $0x60] sm:$0xff] %v3060
        $region44: #{tpu_custom_call.1} parent=31 // pred_fallthru
          _
        %s3075 = sand.u32 %s116, 1
        %s3076 = scalar_lea.sflag [#allocation6], %s3075
        %s3077 = sand.u32 %s116, 1
        %s3078 = smul.addr %s3077, 104
        %s3079 = scalar_lea.vmem [#allocation7], %s3078
        // Predicated region
        $region45: #{tpu_custom_call.1} parent=31 // pred_check
          %p3080 = pneg %p126
        $region46: #{tpu_custom_call.1} parent=31 // pred_check_branch
          %3082 = sbr.rel (%p3080) target = $region48
        $region47: #{tpu_custom_call.1} parent=31 // pred_region
          %s3083 = smul.u32 13, %s22
          %s3085 = ssub.s32 1664, 1664
          %3086 = vsyncadd %s3076, %s3085
          %s3087 = smul.addr %s3083, 128
          %s3088 = scalar_lea.hbm %s3, %s3087
          %s3089 = sshll.u32 %s3079, 4
          %s3090 = int_to_ptr.vmem [resolvable:$true] %s3089
          %3095 = dma.vmem_to_hbm [thread:$0]  %s3090, 1664, %s3088, %s3076, 128, 128, 8
        $region48: #{tpu_custom_call.1} parent=31 // pred_fallthru
          _
      $region32: #{tpu_custom_call.1} parent=5 // pred_fallthru
        _
      %p3096 = scmp.le.s32.totalorder 2, %s13
      // Predicated region
      $region49: #{tpu_custom_call.1} parent=5 // pred_check
        %p3097 = pneg %p3096
      $region50: #{tpu_custom_call.1} parent=5 // pred_check_branch
        %3099 = sbr.rel (%p3097) target = $region52
      $region51: #{tpu_custom_call.1} parent=5 // pred_region
        %s3100 = ssub.s32 %s13, 2
        // Predicated region
        $region53: #{tpu_custom_call.1} parent=51 // pred_check
          %p3101 = pneg %p132
        $region54: #{tpu_custom_call.1} parent=51 // pred_check_branch
          %3103 = sbr.rel (%p3101) target = $region56
        $region55: #{tpu_custom_call.1} parent=51 // pred_region
          %s3104 = sand.u32 %s117, 1
          %s3105 = scalar_lea.sflag [#allocation6], %s3104
          %s3106 = sand.u32 %s117, 1
          %s3107 = smul.addr %s3106, 104
          %s3108 = scalar_lea.vmem [#allocation7], %s3107
          %3109 = dma.done %s3105, 1664
        $region56: #{tpu_custom_call.1} parent=51 // pred_fallthru
          _
      $region52: #{tpu_custom_call.1} parent=5 // pred_fallthru
        _
    $region6: #{tpu_custom_call.1} parent=1 // loop_footer
      %s17 = sadd.s32 1, %s13
    $region7: #{tpu_custom_call.1} parent=1 // loop_footer_branch
      %12 = sbr.rel target = $region3
    $region8: #{tpu_custom_call.1} parent=1 // loop_exit
      _
    %3110 = vsyncpa [#allocation5], 1
    %s3111 = scalar_lea.sflag [#allocation5], 1
    %3112 = vsyncpa %s3111, 1
    %3113 = vsyncpa [#allocation6], 1
    %s3114 = scalar_lea.sflag [#allocation6], 1
    %3115 = vsyncpa %s3114, 1

</llo_original>
